<compile_context>
chip_gen: v7x
topology: tpu7x:2x2x1
jax: 0.10.0
libtpu: 0.0.40
codegen_flags: <defaults>
</compile_context>

<pallas_src>
import functools

import jax
import jax.numpy as jnp
from jax.experimental import pallas as pl
from jax.experimental.pallas import tpu as pltpu


# ----------------------------- shared math ---------------------------------
def _layernorm(x, w, b, eps):
    mu = jnp.mean(x, axis=-1, keepdims=True)
    var = jnp.mean((x - mu) ** 2, axis=-1, keepdims=True)
    return (x - mu) * jax.lax.rsqrt(var + eps) * w + b


def _gelu(x):
    # TODO(synk): torch nn.GELU() default is the exact erf form; the tanh
    # approximation is used here for Mosaic-safe lowering (~1e-3 abs err).
    c = jnp.sqrt(jnp.float32(2.0 / jnp.pi))
    return 0.5 * x * (1.0 + jnp.tanh(c * (x + 0.044715 * x * x * x)))


# ------------------------------- kernel ------------------------------------
def vit_encoder_kernel(
    x_ref, pos_ref,
    ln1w_ref, ln1b_ref,
    wqkv_ref, bqkv_ref,
    wo_ref, bo_ref,
    ln2w_ref, ln2b_ref,
    w1_ref, b1_ref, w2_ref, b2_ref,
    lnfw_ref, lnfb_ref,
    hs_ref, last_ref,
    x_scr, ctx_scr,
    *, num_layers, num_heads, dim_head, eps):
    l = pl.program_id(1)
    D = num_heads * dim_head

    # x = inputs + abs_pos_emb  (done once per batch row, carried over layers)
    @pl.when(l == 0)
    def _():
        x_scr[...] = x_ref[0] + pos_ref[...]

    x = x_scr[...]                                       # (S, D)

    # --- pre-LN + multi-head self-attention ---
    ln1 = _layernorm(x, ln1w_ref[0, 0], ln1b_ref[0, 0], eps)

    # fused QKV projection: one (S, D) @ (D, 3D) MXU dot (scale folded into Wq)
    qkv = jnp.dot(ln1, wqkv_ref[0],
                  preferred_element_type=jnp.float32) + bqkv_ref[0, 0]
    q = qkv[:, 0:D]
    k = qkv[:, D:2 * D]
    v = qkv[:, 2 * D:3 * D]

    # Static unrolled per-head loop of small 2-D dots; head slices are
    # 32-lane aligned.  (At real ViT widths this block would be replaced by a
    # head-batched single-batch-dim einsum; kept 2-D here for robust lowering
    # at dim_head < 128.)
    for h in range(num_heads):
        sl = slice(h * dim_head, (h + 1) * dim_head)
        qh, kh, vh = q[:, sl], k[:, sl], v[:, sl]
        s = jnp.einsum('sd,td->st', qh, kh,
                       preferred_element_type=jnp.float32)
        m = jnp.max(s, axis=-1, keepdims=True)
        e = jnp.exp(s - m)
        p = e * pl.reciprocal(jnp.sum(e, axis=-1, keepdims=True), approx=True)
        ctx_scr[:, sl] = jnp.dot(p, vh, preferred_element_type=jnp.float32)

    # single Wo matmul on the full concatenated context
    attn_out = jnp.dot(ctx_scr[...], wo_ref[0],
                       preferred_element_type=jnp.float32) + bo_ref[0, 0]
    residual = attn_out + x

    # --- pre-LN + MLP ---
    ln2 = _layernorm(residual, ln2w_ref[0, 0], ln2b_ref[0, 0], eps)
    h1 = _gelu(jnp.dot(ln2, w1_ref[0],
                       preferred_element_type=jnp.float32) + b1_ref[0, 0])
    mlp = jnp.dot(h1, w2_ref[0],
                  preferred_element_type=jnp.float32) + b2_ref[0, 0]
    x_new = mlp + residual

    x_scr[...] = x_new
    hs_ref[...] = x_new[None, None]                      # per-layer hidden state

    @pl.when(l == num_layers - 1)
    def _():
        last_ref[...] = _layernorm(x_new, lnfw_ref[0], lnfb_ref[0], eps)[None]


# ------------------------------- wrapper ------------------------------------
def vision_encoder_forward(inputs, abs_pos_emb, p, *, num_heads, eps):
    B, S, D = inputs.shape
    L = p['wq'].shape[0]
    F = p['w1'].shape[-1]
    dim_head = D // num_heads
    scale = jnp.sqrt(jnp.float32(dim_head))

    # One-time weight prep: fuse Q/K/V and fold 1/sqrt(dim_head) into Wq, bq.
    wqkv = jnp.concatenate([p['wq'] / scale, p['wk'], p['wv']], axis=-1)  # (L,D,3D)
    bqkv = jnp.concatenate([p['bq'] / scale, p['bk'], p['bv']], axis=-1)  # (L,1,3D)

    kernel = functools.partial(
        vit_encoder_kernel, num_layers=L, num_heads=num_heads,
        dim_head=dim_head, eps=eps)

    def per_layer(shape):
        nd = len(shape)
        return pl.BlockSpec((1,) + shape, lambda b, l, nd=nd: (l,) + (0,) * nd)

    in_specs = [
        pl.BlockSpec((1, S, D), lambda b, l: (b, 0, 0)),   # inputs (per batch row)
        pl.BlockSpec((S, D), lambda b, l: (0, 0)),         # abs_pos_emb
        per_layer((1, D)), per_layer((1, D)),              # ln1 w/b
        per_layer((D, 3 * D)), per_layer((1, 3 * D)),      # fused Wqkv, bqkv
        per_layer((D, D)), per_layer((1, D)),              # Wo, bo
        per_layer((1, D)), per_layer((1, D)),              # ln2 w/b
        per_layer((D, F)), per_layer((1, F)),              # W1, b1
        per_layer((F, D)), per_layer((1, D)),              # W2, b2
        pl.BlockSpec((1, D), lambda b, l: (0, 0)),         # final LN w
        pl.BlockSpec((1, D), lambda b, l: (0, 0)),         # final LN b
    ]
    out_specs = [
        pl.BlockSpec((1, 1, S, D), lambda b, l: (l, b, 0, 0)),  # hidden_states
        pl.BlockSpec((1, S, D), lambda b, l: (b, 0, 0)),        # last_hidden
    ]
    out_shape = (
        jax.ShapeDtypeStruct((L, B, S, D), jnp.float32),
        jax.ShapeDtypeStruct((B, S, D), jnp.float32),
    )

    hidden_states, last_hidden = pl.pallas_call(
        kernel,
        out_shape=out_shape,
        grid_spec=pltpu.PrefetchScalarGridSpec(
            num_scalar_prefetch=0,
            grid=(B, L),
            in_specs=in_specs,
            out_specs=out_specs,
            scratch_shapes=[pltpu.VMEM((S, D), jnp.float32),   # layer carry
                            pltpu.VMEM((S, D), jnp.float32)],  # attention ctx
        ),
        compiler_params=pltpu.CompilerParams(
            dimension_semantics=("parallel", "arbitrary"),
            vmem_limit_bytes=32 * 1024 * 1024),
    )(
        inputs, abs_pos_emb,
        p['ln1_w'], p['ln1_b'],
        wqkv, bqkv,
        p['wo'], p['bo'],
        p['ln2_w'], p['ln2_b'],
        p['w1'], p['b1'], p['w2'], p['b2'],
        p['lnf_w'], p['lnf_b'],
    )
    # module returns (last_hidden_state, hidden_states)
    return last_hidden, hidden_states


# --------------------------- plain-JAX reference ----------------------------
def _softmax_last(x):
    m = jnp.max(x, axis=-1, keepdims=True)
    e = jnp.exp(x - m)
    return e / jnp.sum(e, axis=-1, keepdims=True)


def reference_forward(inputs, abs_pos_emb, p, *, num_heads, eps):
    B, S, D = inputs.shape
    L = p['wq'].shape[0]
    dh = D // num_heads
    hp = jax.lax.Precision.HIGHEST
    x = inputs + abs_pos_emb[None]
    hs = []
    for l in range(L):
        ln_x = _layernorm(x, p['ln1_w'][l, 0], p['ln1_b'][l, 0], eps)
        q = jnp.einsum('bsd,de->bse', ln_x, p['wq'][l], precision=hp) + p['bq'][l, 0]
        k = jnp.einsum('bsd,de->bse', ln_x, p['wk'][l], precision=hp) + p['bk'][l, 0]
        v = jnp.einsum('bsd,de->bse', ln_x, p['wv'][l], precision=hp) + p['bv'][l, 0]
        qh = q.reshape(B, S, num_heads, dh).transpose(0, 2, 1, 3)
        kh = k.reshape(B, S, num_heads, dh).transpose(0, 2, 1, 3)
        vh = v.reshape(B, S, num_heads, dh).transpose(0, 2, 1, 3)
        scores = jnp.einsum('bhsd,bhtd->bhst', qh, kh, precision=hp) / jnp.sqrt(jnp.float32(dh))
        attn = _softmax_last(scores)
        ctx = jnp.einsum('bhst,bhtd->bhsd', attn, vh, precision=hp)
        ctx = ctx.transpose(0, 2, 1, 3).reshape(B, S, D)
        attn_out = jnp.einsum('bsd,de->bse', ctx, p['wo'][l], precision=hp) + p['bo'][l, 0]
        residual = attn_out + x
        ln2 = _layernorm(residual, p['ln2_w'][l, 0], p['ln2_b'][l, 0], eps)
        h1 = _gelu(jnp.einsum('bsd,df->bsf', ln2, p['w1'][l], precision=hp) + p['b1'][l, 0])
        x = jnp.einsum('bsf,fd->bsd', h1, p['w2'][l], precision=hp) + p['b2'][l, 0] + residual
        hs.append(x)
    last = _layernorm(x, p['lnf_w'][0], p['lnf_b'][0], eps)
    return last, jnp.stack(hs, axis=0)


# ------------------------------- params -------------------------------------
def init_params(key, L, D, F):
    ks = jax.random.split(key, 24)
    n = lambda i, shape, s: s * jax.random.normal(ks[i], shape, jnp.float32)
    p = {
        'ln1_w': 1.0 + 0.1 * jax.random.normal(ks[0], (L, 1, D), jnp.float32),
        'ln1_b': n(1, (L, 1, D), 0.1),
        'wq': n(2, (L, D, D), 1.0 / jnp.sqrt(D)), 'bq': n(3, (L, 1, D), 0.02),
        'wk': n(4, (L, D, D), 1.0 / jnp.sqrt(D)), 'bk': n(5, (L, 1, D), 0.02),
        'wv': n(6, (L, D, D), 1.0 / jnp.sqrt(D)), 'bv': n(7, (L, 1, D), 0.02),
        'wo': n(8, (L, D, D), 1.0 / jnp.sqrt(D)), 'bo': n(9, (L, 1, D), 0.02),
        'ln2_w': 1.0 + 0.1 * jax.random.normal(ks[10], (L, 1, D), jnp.float32),
        'ln2_b': n(11, (L, 1, D), 0.1),
        'w1': n(12, (L, D, F), 1.0 / jnp.sqrt(D)), 'b1': n(13, (L, 1, F), 0.02),
        'w2': n(14, (L, F, D), 1.0 / jnp.sqrt(F)), 'b2': n(15, (L, 1, D), 0.02),
        'lnf_w': 1.0 + 0.1 * jax.random.normal(ks[16], (1, D), jnp.float32),
        'lnf_b': n(17, (1, D), 0.1),
    }
    return p


# --------------------------------- main --------------------------------------
if __name__ == "__main__":
    # Small but lane-dense config: D multiple of 128 so every matmul operand,
    # activation tile and HBM store is an unmasked full-lane access.
    B, S, D = 2, 8, 128            # batch, num_patches (seq), dim_model
    NUM_HEADS, DIM_MLP, L = 4, 256, 3
    EPS = 0.02

    key = jax.random.PRNGKey(0)
    k_in, k_pos, k_par = jax.random.split(key, 3)
    inputs = jax.random.normal(k_in, (B, S, D), jnp.float32)
    abs_pos_emb = jax.random.normal(k_pos, (S, D), jnp.float32)
    params = init_params(k_par, L, D, DIM_MLP)

    last, hidden = vision_encoder_forward(
        inputs, abs_pos_emb, params, num_heads=NUM_HEADS, eps=EPS)
    last = jax.block_until_ready(last)
    hidden = jax.block_until_ready(hidden)

    ref_last, ref_hidden = reference_forward(
        inputs, abs_pos_emb, params, num_heads=NUM_HEADS, eps=EPS)

    assert last.shape == (B, S, D) and hidden.shape == (L, B, S, D)
    assert jnp.allclose(last, ref_last, rtol=1e-2, atol=1e-2), "last_hidden mismatch"
    assert jnp.allclose(hidden, ref_hidden, rtol=1e-2, atol=1e-2), "hidden_states mismatch"

    print("KERNEL_OK")
</pallas_src>

<mosaic_0001>
module attributes {stable_mosaic.version = 11 : i64} {
  func.func @vit_encoder_kernel(%arg0: i32, %arg1: i32, %arg2: memref<1x8x128xf32, #tpu.memory_space<vmem>>, %arg3: memref<8x128xf32, #tpu.memory_space<vmem>>, %arg4: memref<1x1x128xf32, #tpu.memory_space<vmem>>, %arg5: memref<1x1x128xf32, #tpu.memory_space<vmem>>, %arg6: memref<1x128x384xf32, #tpu.memory_space<vmem>>, %arg7: memref<1x1x384xf32, #tpu.memory_space<vmem>>, %arg8: memref<1x128x128xf32, #tpu.memory_space<vmem>>, %arg9: memref<1x1x128xf32, #tpu.memory_space<vmem>>, %arg10: memref<1x1x128xf32, #tpu.memory_space<vmem>>, %arg11: memref<1x1x128xf32, #tpu.memory_space<vmem>>, %arg12: memref<1x128x256xf32, #tpu.memory_space<vmem>>, %arg13: memref<1x1x256xf32, #tpu.memory_space<vmem>>, %arg14: memref<1x256x128xf32, #tpu.memory_space<vmem>>, %arg15: memref<1x1x128xf32, #tpu.memory_space<vmem>>, %arg16: memref<1x128xf32, #tpu.memory_space<vmem>>, %arg17: memref<1x128xf32, #tpu.memory_space<vmem>>, %arg18: memref<1x1x8x128xf32, #tpu.memory_space<vmem>>, %arg19: memref<1x8x128xf32, #tpu.memory_space<vmem>>, %arg20: memref<8x128xf32, #tpu.memory_space<vmem>>, %arg21: memref<8x128xf32, #tpu.memory_space<vmem>>) attributes {dimension_semantics = [#tpu.dimension_semantics<parallel>, #tpu.dimension_semantics<arbitrary>], iteration_bounds = array<i64: 2, 3>, scalar_prefetch = 0 : i64, scratch_operands = 2 : i64, tpu.core_type = #tpu.core_type<tc>, window_params = [{transform_indices = @transform_0, window_bounds = array<i64: 1, 8, 128>}, {pipeline_mode = #tpu.pipeline_mode<synchronous>, transform_indices = @transform_1, window_bounds = array<i64: 8, 128>}, {transform_indices = @transform_2, window_bounds = array<i64: 1, 1, 128>}, {transform_indices = @transform_3, window_bounds = array<i64: 1, 1, 128>}, {transform_indices = @transform_4, window_bounds = array<i64: 1, 128, 384>}, {transform_indices = @transform_5, window_bounds = array<i64: 1, 1, 384>}, {transform_indices = @transform_6, window_bounds = array<i64: 1, 128, 128>}, {transform_indices = @transform_7, window_bounds = array<i64: 1, 1, 128>}, {transform_indices = @transform_8, window_bounds = array<i64: 1, 1, 128>}, {transform_indices = @transform_9, window_bounds = array<i64: 1, 1, 128>}, {transform_indices = @transform_10, window_bounds = array<i64: 1, 128, 256>}, {transform_indices = @transform_11, window_bounds = array<i64: 1, 1, 256>}, {transform_indices = @transform_12, window_bounds = array<i64: 1, 256, 128>}, {transform_indices = @transform_13, window_bounds = array<i64: 1, 1, 128>}, {pipeline_mode = #tpu.pipeline_mode<synchronous>, transform_indices = @transform_14, window_bounds = array<i64: 1, 128>}, {pipeline_mode = #tpu.pipeline_mode<synchronous>, transform_indices = @transform_15, window_bounds = array<i64: 1, 128>}, {transform_indices = @transform_16, window_bounds = array<i64: 1, 1, 8, 128>}, {transform_indices = @transform_17, window_bounds = array<i64: 1, 8, 128>}]} {
    %c0_i32 = arith.constant 0 : i32
    %0 = arith.cmpi eq, %arg1, %c0_i32 : i32
    %1 = arith.extui %0 : i1 to i32
    %c0_i32_0 = arith.constant 0 : i32
    %2 = arith.cmpi ne, %1, %c0_i32_0 : i32
    scf.if %2 {
      %c0_85 = arith.constant 0 : index
      %c0_86 = arith.constant 0 : index
      %c0_87 = arith.constant 0 : index
      %182 = vector.load %arg2[%c0_85, %c0_86, %c0_87] : memref<1x8x128xf32, #tpu.memory_space<vmem>>, vector<1x8x128xf32>
      %183 = vector.shape_cast %182 : vector<1x8x128xf32> to vector<8x128xf32>
      %c0_88 = arith.constant 0 : index
      %c0_89 = arith.constant 0 : index
      %184 = vector.load %arg3[%c0_88, %c0_89] : memref<8x128xf32, #tpu.memory_space<vmem>>, vector<8x128xf32>
      %185 = arith.addf %183, %184 : vector<8x128xf32>
      %c0_90 = arith.constant 0 : index
      %c0_91 = arith.constant 0 : index
      %186 = vector.load %arg20[%c0_90, %c0_91] : memref<8x128xf32, #tpu.memory_space<vmem>>, vector<8x128xf32>
      tpu.vector_store %arg20[%c0_90, %c0_91], %185 {strides = array<i32>} : memref<8x128xf32, #tpu.memory_space<vmem>>, vector<8x128xf32>,
    } else {
    }
    %c0 = arith.constant 0 : index
    %c0_1 = arith.constant 0 : index
    %3 = vector.load %arg20[%c0, %c0_1] : memref<8x128xf32, #tpu.memory_space<vmem>>, vector<8x128xf32>
    %c0_2 = arith.constant 0 : index
    %c0_3 = arith.constant 0 : index
    %c0_4 = arith.constant 0 : index
    %4 = vector.load %arg4[%c0_2, %c0_3, %c0_4] : memref<1x1x128xf32, #tpu.memory_space<vmem>>, vector<1x1x128xf32>
    %5 = vector.shape_cast %4 : vector<1x1x128xf32> to vector<128xf32>
    %c0_5 = arith.constant 0 : index
    %c0_6 = arith.constant 0 : index
    %c0_7 = arith.constant 0 : index
    %6 = vector.load %arg5[%c0_5, %c0_6, %c0_7] : memref<1x1x128xf32, #tpu.memory_space<vmem>>, vector<1x1x128xf32>
    %7 = vector.shape_cast %6 : vector<1x1x128xf32> to vector<128xf32>
    %cst = arith.constant dense<0.000000e+00> : vector<8xf32>
    %8 = vector.multi_reduction <add>, %3, %cst [1] : vector<8x128xf32> to vector<8xf32>
    %9 = vector.shape_cast %8 : vector<8xf32> to vector<8x1xf32>
    %cst_8 = arith.constant 1.280000e+02 : f32
    %10 = vector.broadcast %cst_8 : f32 to vector<8x1xf32>
    %11 = arith.divf %9, %10 : vector<8x1xf32>
    %12 = vector.broadcast %11 : vector<8x1xf32> to vector<8x128xf32>
    %13 = arith.subf %3, %12 : vector<8x128xf32>
    %14 = arith.mulf %13, %13 : vector<8x128xf32>
    %cst_9 = arith.constant dense<0.000000e+00> : vector<8xf32>
    %15 = vector.multi_reduction <add>, %14, %cst_9 [1] : vector<8x128xf32> to vector<8xf32>
    %16 = vector.shape_cast %15 : vector<8xf32> to vector<8x1xf32>
    %cst_10 = arith.constant 1.280000e+02 : f32
    %17 = vector.broadcast %cst_10 : f32 to vector<8x1xf32>
    %18 = arith.divf %16, %17 : vector<8x1xf32>
    %19 = vector.broadcast %11 : vector<8x1xf32> to vector<8x128xf32>
    %20 = arith.subf %3, %19 : vector<8x128xf32>
    %cst_11 = arith.constant 2.000000e-02 : f32
    %21 = vector.broadcast %cst_11 : f32 to vector<8x1xf32>
    %22 = arith.addf %18, %21 : vector<8x1xf32>
    %23 = math.rsqrt %22 : vector<8x1xf32>
    %24 = vector.broadcast %23 : vector<8x1xf32> to vector<8x128xf32>
    %25 = arith.mulf %20, %24 : vector<8x128xf32>
    %26 = vector.shape_cast %5 : vector<128xf32> to vector<1x128xf32>
    %27 = vector.broadcast %26 : vector<1x128xf32> to vector<8x128xf32>
    %28 = arith.mulf %25, %27 : vector<8x128xf32>
    %29 = vector.shape_cast %7 : vector<128xf32> to vector<1x128xf32>
    %30 = vector.broadcast %29 : vector<1x128xf32> to vector<8x128xf32>
    %31 = arith.addf %28, %30 : vector<8x128xf32>
    %c0_12 = arith.constant 0 : index
    %c0_13 = arith.constant 0 : index
    %c0_14 = arith.constant 0 : index
    %32 = vector.load %arg6[%c0_12, %c0_13, %c0_14] : memref<1x128x384xf32, #tpu.memory_space<vmem>>, vector<1x128x384xf32>
    %33 = vector.shape_cast %32 : vector<1x128x384xf32> to vector<128x384xf32>
    %cst_15 = arith.constant dense<0.000000e+00> : vector<8x384xf32>
    %34 = tpu.matmul %31, %33, %cst_15 {dimension_numbers = #tpu.dot_dimension_numbers<[1], [0], [0], [1], [0, 0, 1, 1], [], []>} : vector<8x128xf32>, vector<128x384xf32>, vector<8x384xf32> -> vector<8x384xf32>
    %c0_16 = arith.constant 0 : index
    %c0_17 = arith.constant 0 : index
    %c0_18 = arith.constant 0 : index
    %35 = vector.load %arg7[%c0_16, %c0_17, %c0_18] : memref<1x1x384xf32, #tpu.memory_space<vmem>>, vector<1x1x384xf32>
    %36 = vector.shape_cast %35 : vector<1x1x384xf32> to vector<384xf32>
    %37 = vector.shape_cast %36 : vector<384xf32> to vector<1x384xf32>
    %38 = vector.broadcast %37 : vector<1x384xf32> to vector<8x384xf32>
    %39 = arith.addf %34, %38 : vector<8x384xf32>
    %40 = vector.extract_strided_slice %39 {offsets = [0, 0], sizes = [8, 128], strides = [1, 1]} : vector<8x384xf32> to vector<8x128xf32>
    %41 = vector.extract_strided_slice %39 {offsets = [0, 128], sizes = [8, 128], strides = [1, 1]} : vector<8x384xf32> to vector<8x128xf32>
    %42 = vector.extract_strided_slice %39 {offsets = [0, 256], sizes = [8, 128], strides = [1, 1]} : vector<8x384xf32> to vector<8x128xf32>
    %43 = vector.extract_strided_slice %40 {offsets = [0, 0], sizes = [8, 32], strides = [1, 1]} : vector<8x128xf32> to vector<8x32xf32>
    %44 = vector.extract_strided_slice %41 {offsets = [0, 0], sizes = [8, 32], strides = [1, 1]} : vector<8x128xf32> to vector<8x32xf32>
    %45 = vector.extract_strided_slice %42 {offsets = [0, 0], sizes = [8, 32], strides = [1, 1]} : vector<8x128xf32> to vector<8x32xf32>
    "tpu.trace_start"() <{level = 10 : i32, message = "sd,td->st"}> : () -> ()
    %cst_19 = arith.constant dense<0.000000e+00> : vector<8x8xf32>
    %46 = tpu.matmul %43, %44, %cst_19 {dimension_numbers = #tpu.dot_dimension_numbers<[1], [1], [0], [0], [0, 0, 1, 0], [], []>} : vector<8x32xf32>, vector<8x32xf32>, vector<8x8xf32> -> vector<8x8xf32>
    "tpu.trace_stop"() : () -> ()
    %cst_20 = arith.constant dense<0xFF800000> : vector<8xf32>
    %47 = vector.multi_reduction <maximumf>, %46, %cst_20 [1] : vector<8x8xf32> to vector<8xf32>
    %48 = vector.shape_cast %47 : vector<8xf32> to vector<8x1xf32>
    %49 = vector.broadcast %48 : vector<8x1xf32> to vector<8x8xf32>
    %50 = arith.subf %46, %49 : vector<8x8xf32>
    %51 = math.exp %50 : vector<8x8xf32>
    %cst_21 = arith.constant dense<0.000000e+00> : vector<8xf32>
    %52 = vector.multi_reduction <add>, %51, %cst_21 [1] : vector<8x8xf32> to vector<8xf32>
    %53 = vector.shape_cast %52 : vector<8xf32> to vector<8x1xf32>
    %54 = tpu.reciprocal %53 {approx = true} : vector<8x1xf32> -> vector<8x1xf32>
    %55 = vector.broadcast %54 : vector<8x1xf32> to vector<8x8xf32>
    %56 = arith.mulf %51, %55 : vector<8x8xf32>
    %cst_22 = arith.constant dense<0.000000e+00> : vector<8x32xf32>
    %57 = tpu.matmul %56, %45, %cst_22 {dimension_numbers = #tpu.dot_dimension_numbers<[1], [0], [0], [1], [0, 0, 1, 1], [], []>} : vector<8x8xf32>, vector<8x32xf32>, vector<8x32xf32> -> vector<8x32xf32>
    %c0_23 = arith.constant 0 : index
    %c0_24 = arith.constant 0 : index
    %58 = vector.load %arg21[%c0_23, %c0_24] : memref<8x128xf32, #tpu.memory_space<vmem>>, vector<8x32xf32>
    tpu.vector_store %arg21[%c0_23, %c0_24], %57 {strides = array<i32>} : memref<8x128xf32, #tpu.memory_space<vmem>>, vector<8x32xf32>,
    %59 = vector.extract_strided_slice %40 {offsets = [0, 32], sizes = [8, 32], strides = [1, 1]} : vector<8x128xf32> to vector<8x32xf32>
    %60 = vector.extract_strided_slice %41 {offsets = [0, 32], sizes = [8, 32], strides = [1, 1]} : vector<8x128xf32> to vector<8x32xf32>
    %61 = vector.extract_strided_slice %42 {offsets = [0, 32], sizes = [8, 32], strides = [1, 1]} : vector<8x128xf32> to vector<8x32xf32>
    "tpu.trace_start"() <{level = 10 : i32, message = "sd,td->st"}> : () -> ()
    %cst_25 = arith.constant dense<0.000000e+00> : vector<8x8xf32>
    %62 = tpu.matmul %59, %60, %cst_25 {dimension_numbers = #tpu.dot_dimension_numbers<[1], [1], [0], [0], [0, 0, 1, 0], [], []>} : vector<8x32xf32>, vector<8x32xf32>, vector<8x8xf32> -> vector<8x8xf32>
    "tpu.trace_stop"() : () -> ()
    %cst_26 = arith.constant dense<0xFF800000> : vector<8xf32>
    %63 = vector.multi_reduction <maximumf>, %62, %cst_26 [1] : vector<8x8xf32> to vector<8xf32>
    %64 = vector.shape_cast %63 : vector<8xf32> to vector<8x1xf32>
    %65 = vector.broadcast %64 : vector<8x1xf32> to vector<8x8xf32>
    %66 = arith.subf %62, %65 : vector<8x8xf32>
    %67 = math.exp %66 : vector<8x8xf32>
    %cst_27 = arith.constant dense<0.000000e+00> : vector<8xf32>
    %68 = vector.multi_reduction <add>, %67, %cst_27 [1] : vector<8x8xf32> to vector<8xf32>
    %69 = vector.shape_cast %68 : vector<8xf32> to vector<8x1xf32>
    %70 = tpu.reciprocal %69 {approx = true} : vector<8x1xf32> -> vector<8x1xf32>
    %71 = vector.broadcast %70 : vector<8x1xf32> to vector<8x8xf32>
    %72 = arith.mulf %67, %71 : vector<8x8xf32>
    %cst_28 = arith.constant dense<0.000000e+00> : vector<8x32xf32>
    %73 = tpu.matmul %72, %61, %cst_28 {dimension_numbers = #tpu.dot_dimension_numbers<[1], [0], [0], [1], [0, 0, 1, 1], [], []>} : vector<8x8xf32>, vector<8x32xf32>, vector<8x32xf32> -> vector<8x32xf32>
    %c0_29 = arith.constant 0 : index
    %c32 = arith.constant 32 : index
    %74 = vector.load %arg21[%c0_29, %c32] : memref<8x128xf32, #tpu.memory_space<vmem>>, vector<8x32xf32>
    tpu.vector_store %arg21[%c0_29, %c32], %73 {strides = array<i32>} : memref<8x128xf32, #tpu.memory_space<vmem>>, vector<8x32xf32>,
    %75 = vector.extract_strided_slice %40 {offsets = [0, 64], sizes = [8, 32], strides = [1, 1]} : vector<8x128xf32> to vector<8x32xf32>
    %76 = vector.extract_strided_slice %41 {offsets = [0, 64], sizes = [8, 32], strides = [1, 1]} : vector<8x128xf32> to vector<8x32xf32>
    %77 = vector.extract_strided_slice %42 {offsets = [0, 64], sizes = [8, 32], strides = [1, 1]} : vector<8x128xf32> to vector<8x32xf32>
    "tpu.trace_start"() <{level = 10 : i32, message = "sd,td->st"}> : () -> ()
    %cst_30 = arith.constant dense<0.000000e+00> : vector<8x8xf32>
    %78 = tpu.matmul %75, %76, %cst_30 {dimension_numbers = #tpu.dot_dimension_numbers<[1], [1], [0], [0], [0, 0, 1, 0], [], []>} : vector<8x32xf32>, vector<8x32xf32>, vector<8x8xf32> -> vector<8x8xf32>
    "tpu.trace_stop"() : () -> ()
    %cst_31 = arith.constant dense<0xFF800000> : vector<8xf32>
    %79 = vector.multi_reduction <maximumf>, %78, %cst_31 [1] : vector<8x8xf32> to vector<8xf32>
    %80 = vector.shape_cast %79 : vector<8xf32> to vector<8x1xf32>
    %81 = vector.broadcast %80 : vector<8x1xf32> to vector<8x8xf32>
    %82 = arith.subf %78, %81 : vector<8x8xf32>
    %83 = math.exp %82 : vector<8x8xf32>
    %cst_32 = arith.constant dense<0.000000e+00> : vector<8xf32>
    %84 = vector.multi_reduction <add>, %83, %cst_32 [1] : vector<8x8xf32> to vector<8xf32>
    %85 = vector.shape_cast %84 : vector<8xf32> to vector<8x1xf32>
    %86 = tpu.reciprocal %85 {approx = true} : vector<8x1xf32> -> vector<8x1xf32>
    %87 = vector.broadcast %86 : vector<8x1xf32> to vector<8x8xf32>
    %88 = arith.mulf %83, %87 : vector<8x8xf32>
    %cst_33 = arith.constant dense<0.000000e+00> : vector<8x32xf32>
    %89 = tpu.matmul %88, %77, %cst_33 {dimension_numbers = #tpu.dot_dimension_numbers<[1], [0], [0], [1], [0, 0, 1, 1], [], []>} : vector<8x8xf32>, vector<8x32xf32>, vector<8x32xf32> -> vector<8x32xf32>
    %c0_34 = arith.constant 0 : index
    %c64 = arith.constant 64 : index
    %90 = vector.load %arg21[%c0_34, %c64] : memref<8x128xf32, #tpu.memory_space<vmem>>, vector<8x32xf32>
    tpu.vector_store %arg21[%c0_34, %c64], %89 {strides = array<i32>} : memref<8x128xf32, #tpu.memory_space<vmem>>, vector<8x32xf32>,
    %91 = vector.extract_strided_slice %40 {offsets = [0, 96], sizes = [8, 32], strides = [1, 1]} : vector<8x128xf32> to vector<8x32xf32>
    %92 = vector.extract_strided_slice %41 {offsets = [0, 96], sizes = [8, 32], strides = [1, 1]} : vector<8x128xf32> to vector<8x32xf32>
    %93 = vector.extract_strided_slice %42 {offsets = [0, 96], sizes = [8, 32], strides = [1, 1]} : vector<8x128xf32> to vector<8x32xf32>
    "tpu.trace_start"() <{level = 10 : i32, message = "sd,td->st"}> : () -> ()
    %cst_35 = arith.constant dense<0.000000e+00> : vector<8x8xf32>
    %94 = tpu.matmul %91, %92, %cst_35 {dimension_numbers = #tpu.dot_dimension_numbers<[1], [1], [0], [0], [0, 0, 1, 0], [], []>} : vector<8x32xf32>, vector<8x32xf32>, vector<8x8xf32> -> vector<8x8xf32>
    "tpu.trace_stop"() : () -> ()
    %cst_36 = arith.constant dense<0xFF800000> : vector<8xf32>
    %95 = vector.multi_reduction <maximumf>, %94, %cst_36 [1] : vector<8x8xf32> to vector<8xf32>
    %96 = vector.shape_cast %95 : vector<8xf32> to vector<8x1xf32>
    %97 = vector.broadcast %96 : vector<8x1xf32> to vector<8x8xf32>
    %98 = arith.subf %94, %97 : vector<8x8xf32>
    %99 = math.exp %98 : vector<8x8xf32>
    %cst_37 = arith.constant dense<0.000000e+00> : vector<8xf32>
    %100 = vector.multi_reduction <add>, %99, %cst_37 [1] : vector<8x8xf32> to vector<8xf32>
    %101 = vector.shape_cast %100 : vector<8xf32> to vector<8x1xf32>
    %102 = tpu.reciprocal %101 {approx = true} : vector<8x1xf32> -> vector<8x1xf32>
    %103 = vector.broadcast %102 : vector<8x1xf32> to vector<8x8xf32>
    %104 = arith.mulf %99, %103 : vector<8x8xf32>
    %cst_38 = arith.constant dense<0.000000e+00> : vector<8x32xf32>
    %105 = tpu.matmul %104, %93, %cst_38 {dimension_numbers = #tpu.dot_dimension_numbers<[1], [0], [0], [1], [0, 0, 1, 1], [], []>} : vector<8x8xf32>, vector<8x32xf32>, vector<8x32xf32> -> vector<8x32xf32>
    %c0_39 = arith.constant 0 : index
    %c96 = arith.constant 96 : index
    %106 = vector.load %arg21[%c0_39, %c96] : memref<8x128xf32, #tpu.memory_space<vmem>>, vector<8x32xf32>
    tpu.vector_store %arg21[%c0_39, %c96], %105 {strides = array<i32>} : memref<8x128xf32, #tpu.memory_space<vmem>>, vector<8x32xf32>,
    %c0_40 = arith.constant 0 : index
    %c0_41 = arith.constant 0 : index
    %107 = vector.load %arg21[%c0_40, %c0_41] : memref<8x128xf32, #tpu.memory_space<vmem>>, vector<8x128xf32>
    %c0_42 = arith.constant 0 : index
    %c0_43 = arith.constant 0 : index
    %c0_44 = arith.constant 0 : index
    %108 = vector.load %arg8[%c0_42, %c0_43, %c0_44] : memref<1x128x128xf32, #tpu.memory_space<vmem>>, vector<1x128x128xf32>
    %109 = vector.shape_cast %108 : vector<1x128x128xf32> to vector<128x128xf32>
    %cst_45 = arith.constant dense<0.000000e+00> : vector<8x128xf32>
    %110 = tpu.matmul %107, %109, %cst_45 {dimension_numbers = #tpu.dot_dimension_numbers<[1], [0], [0], [1], [0, 0, 1, 1], [], []>} : vector<8x128xf32>, vector<128x128xf32>, vector<8x128xf32> -> vector<8x128xf32>
    %c0_46 = arith.constant 0 : index
    %c0_47 = arith.constant 0 : index
    %c0_48 = arith.constant 0 : index
    %111 = vector.load %arg9[%c0_46, %c0_47, %c0_48] : memref<1x1x128xf32, #tpu.memory_space<vmem>>, vector<1x1x128xf32>
    %112 = vector.shape_cast %111 : vector<1x1x128xf32> to vector<128xf32>
    %113 = vector.shape_cast %112 : vector<128xf32> to vector<1x128xf32>
    %114 = vector.broadcast %113 : vector<1x128xf32> to vector<8x128xf32>
    %115 = arith.addf %110, %114 : vector<8x128xf32>
    %116 = arith.addf %115, %3 : vector<8x128xf32>
    %c0_49 = arith.constant 0 : index
    %c0_50 = arith.constant 0 : index
    %c0_51 = arith.constant 0 : index
    %117 = vector.load %arg10[%c0_49, %c0_50, %c0_51] : memref<1x1x128xf32, #tpu.memory_space<vmem>>, vector<1x1x128xf32>
    %118 = vector.shape_cast %117 : vector<1x1x128xf32> to vector<128xf32>
    %c0_52 = arith.constant 0 : index
    %c0_53 = arith.constant 0 : index
    %c0_54 = arith.constant 0 : index
    %119 = vector.load %arg11[%c0_52, %c0_53, %c0_54] : memref<1x1x128xf32, #tpu.memory_space<vmem>>, vector<1x1x128xf32>
    %120 = vector.shape_cast %119 : vector<1x1x128xf32> to vector<128xf32>
    %cst_55 = arith.constant dense<0.000000e+00> : vector<8xf32>
    %121 = vector.multi_reduction <add>, %116, %cst_55 [1] : vector<8x128xf32> to vector<8xf32>
    %122 = vector.shape_cast %121 : vector<8xf32> to vector<8x1xf32>
    %cst_56 = arith.constant 1.280000e+02 : f32
    %123 = vector.broadcast %cst_56 : f32 to vector<8x1xf32>
    %124 = arith.divf %122, %123 : vector<8x1xf32>
    %125 = vector.broadcast %124 : vector<8x1xf32> to vector<8x128xf32>
    %126 = arith.subf %116, %125 : vector<8x128xf32>
    %127 = arith.mulf %126, %126 : vector<8x128xf32>
    %cst_57 = arith.constant dense<0.000000e+00> : vector<8xf32>
    %128 = vector.multi_reduction <add>, %127, %cst_57 [1] : vector<8x128xf32> to vector<8xf32>
    %129 = vector.shape_cast %128 : vector<8xf32> to vector<8x1xf32>
    %cst_58 = arith.constant 1.280000e+02 : f32
    %130 = vector.broadcast %cst_58 : f32 to vector<8x1xf32>
    %131 = arith.divf %129, %130 : vector<8x1xf32>
    %132 = vector.broadcast %124 : vector<8x1xf32> to vector<8x128xf32>
    %133 = arith.subf %116, %132 : vector<8x128xf32>
    %cst_59 = arith.constant 2.000000e-02 : f32
    %134 = vector.broadcast %cst_59 : f32 to vector<8x1xf32>
    %135 = arith.addf %131, %134 : vector<8x1xf32>
    %136 = math.rsqrt %135 : vector<8x1xf32>
    %137 = vector.broadcast %136 : vector<8x1xf32> to vector<8x128xf32>
    %138 = arith.mulf %133, %137 : vector<8x128xf32>
    %139 = vector.shape_cast %118 : vector<128xf32> to vector<1x128xf32>
    %140 = vector.broadcast %139 : vector<1x128xf32> to vector<8x128xf32>
    %141 = arith.mulf %138, %140 : vector<8x128xf32>
    %142 = vector.shape_cast %120 : vector<128xf32> to vector<1x128xf32>
    %143 = vector.broadcast %142 : vector<1x128xf32> to vector<8x128xf32>
    %144 = arith.addf %141, %143 : vector<8x128xf32>
    %c0_60 = arith.constant 0 : index
    %c0_61 = arith.constant 0 : index
    %c0_62 = arith.constant 0 : index
    %145 = vector.load %arg12[%c0_60, %c0_61, %c0_62] : memref<1x128x256xf32, #tpu.memory_space<vmem>>, vector<1x128x256xf32>
    %146 = vector.shape_cast %145 : vector<1x128x256xf32> to vector<128x256xf32>
    %cst_63 = arith.constant dense<0.000000e+00> : vector<8x256xf32>
    %147 = tpu.matmul %144, %146, %cst_63 {dimension_numbers = #tpu.dot_dimension_numbers<[1], [0], [0], [1], [0, 0, 1, 1], [], []>} : vector<8x128xf32>, vector<128x256xf32>, vector<8x256xf32> -> vector<8x256xf32>
    %c0_64 = arith.constant 0 : index
    %c0_65 = arith.constant 0 : index
    %c0_66 = arith.constant 0 : index
    %148 = vector.load %arg13[%c0_64, %c0_65, %c0_66] : memref<1x1x256xf32, #tpu.memory_space<vmem>>, vector<1x1x256xf32>
    %149 = vector.shape_cast %148 : vector<1x1x256xf32> to vector<256xf32>
    %150 = vector.shape_cast %149 : vector<256xf32> to vector<1x256xf32>
    %151 = vector.broadcast %150 : vector<1x256xf32> to vector<8x256xf32>
    %152 = arith.addf %147, %151 : vector<8x256xf32>
    %cst_67 = arith.constant 0.636619746 : f32
    %153 = math.sqrt %cst_67 : f32
    %cst_68 = arith.constant 5.000000e-01 : f32
    %154 = vector.broadcast %cst_68 : f32 to vector<8x256xf32>
    %155 = arith.mulf %154, %152 : vector<8x256xf32>
    %cst_69 = arith.constant 4.471500e-02 : f32
    %156 = vector.broadcast %cst_69 : f32 to vector<8x256xf32>
    %157 = arith.mulf %156, %152 : vector<8x256xf32>
    %158 = arith.mulf %157, %152 : vector<8x256xf32>
    %159 = arith.mulf %158, %152 : vector<8x256xf32>
    %160 = arith.addf %152, %159 : vector<8x256xf32>
    %161 = vector.broadcast %153 : f32 to vector<8x256xf32>
    %162 = arith.mulf %161, %160 : vector<8x256xf32>
    %163 = math.tanh %162 : vector<8x256xf32>
    %cst_70 = arith.constant 1.000000e+00 : f32
    %164 = vector.broadcast %cst_70 : f32 to vector<8x256xf32>
    %165 = arith.addf %164, %163 : vector<8x256xf32>
    %166 = arith.mulf %155, %165 : vector<8x256xf32>
    %c0_71 = arith.constant 0 : index
    %c0_72 = arith.constant 0 : index
    %c0_73 = arith.constant 0 : index
    %167 = vector.load %arg14[%c0_71, %c0_72, %c0_73] : memref<1x256x128xf32, #tpu.memory_space<vmem>>, vector<1x256x128xf32>
    %168 = vector.shape_cast %167 : vector<1x256x128xf32> to vector<256x128xf32>
    %cst_74 = arith.constant dense<0.000000e+00> : vector<8x128xf32>
    %169 = tpu.matmul %166, %168, %cst_74 {dimension_numbers = #tpu.dot_dimension_numbers<[1], [0], [0], [1], [0, 0, 1, 1], [], []>} : vector<8x256xf32>, vector<256x128xf32>, vector<8x128xf32> -> vector<8x128xf32>
    %c0_75 = arith.constant 0 : index
    %c0_76 = arith.constant 0 : index
    %c0_77 = arith.constant 0 : index
    %170 = vector.load %arg15[%c0_75, %c0_76, %c0_77] : memref<1x1x128xf32, #tpu.memory_space<vmem>>, vector<1x1x128xf32>
    %171 = vector.shape_cast %170 : vector<1x1x128xf32> to vector<128xf32>
    %172 = vector.shape_cast %171 : vector<128xf32> to vector<1x128xf32>
    %173 = vector.broadcast %172 : vector<1x128xf32> to vector<8x128xf32>
    %174 = arith.addf %169, %173 : vector<8x128xf32>
    %175 = arith.addf %174, %116 : vector<8x128xf32>
    %c0_78 = arith.constant 0 : index
    %c0_79 = arith.constant 0 : index
    %176 = vector.load %arg20[%c0_78, %c0_79] : memref<8x128xf32, #tpu.memory_space<vmem>>, vector<8x128xf32>
    tpu.vector_store %arg20[%c0_78, %c0_79], %175 {strides = array<i32>} : memref<8x128xf32, #tpu.memory_space<vmem>>, vector<8x128xf32>,
    %177 = vector.shape_cast %175 : vector<8x128xf32> to vector<1x1x8x128xf32>
    %c0_80 = arith.constant 0 : index
    %c0_81 = arith.constant 0 : index
    %c0_82 = arith.constant 0 : index
    %c0_83 = arith.constant 0 : index
    %178 = vector.load %arg18[%c0_80, %c0_81, %c0_82, %c0_83] : memref<1x1x8x128xf32, #tpu.memory_space<vmem>>, vector<1x1x8x128xf32>
    tpu.vector_store %arg18[%c0_80, %c0_81, %c0_82, %c0_83], %177 {strides = array<i32>} : memref<1x1x8x128xf32, #tpu.memory_space<vmem>>, vector<1x1x8x128xf32>,
    %c2_i32 = arith.constant 2 : i32
    %179 = arith.cmpi eq, %arg1, %c2_i32 : i32
    %180 = arith.extui %179 : i1 to i32
    %c0_i32_84 = arith.constant 0 : i32
    %181 = arith.cmpi ne, %180, %c0_i32_84 : i32
    scf.if %181 {
      %c0_85 = arith.constant 0 : index
      %c0_86 = arith.constant 0 : index
      %182 = vector.load %arg16[%c0_85, %c0_86] : memref<1x128xf32, #tpu.memory_space<vmem>>, vector<1x128xf32>
      %183 = vector.shape_cast %182 : vector<1x128xf32> to vector<128xf32>
      %c0_87 = arith.constant 0 : index
      %c0_88 = arith.constant 0 : index
      %184 = vector.load %arg17[%c0_87, %c0_88] : memref<1x128xf32, #tpu.memory_space<vmem>>, vector<1x128xf32>
      %185 = vector.shape_cast %184 : vector<1x128xf32> to vector<128xf32>
      %cst_89 = arith.constant dense<0.000000e+00> : vector<8xf32>
      %186 = vector.multi_reduction <add>, %175, %cst_89 [1] : vector<8x128xf32> to vector<8xf32>
      %187 = vector.shape_cast %186 : vector<8xf32> to vector<8x1xf32>
      %cst_90 = arith.constant 1.280000e+02 : f32
      %188 = vector.broadcast %cst_90 : f32 to vector<8x1xf32>
      %189 = arith.divf %187, %188 : vector<8x1xf32>
      %190 = vector.broadcast %189 : vector<8x1xf32> to vector<8x128xf32>
      %191 = arith.subf %175, %190 : vector<8x128xf32>
      %192 = arith.mulf %191, %191 : vector<8x128xf32>
      %cst_91 = arith.constant dense<0.000000e+00> : vector<8xf32>
      %193 = vector.multi_reduction <add>, %192, %cst_91 [1] : vector<8x128xf32> to vector<8xf32>
      %194 = vector.shape_cast %193 : vector<8xf32> to vector<8x1xf32>
      %cst_92 = arith.constant 1.280000e+02 : f32
      %195 = vector.broadcast %cst_92 : f32 to vector<8x1xf32>
      %196 = arith.divf %194, %195 : vector<8x1xf32>
      %197 = vector.broadcast %189 : vector<8x1xf32> to vector<8x128xf32>
      %198 = arith.subf %175, %197 : vector<8x128xf32>
      %cst_93 = arith.constant 2.000000e-02 : f32
      %199 = vector.broadcast %cst_93 : f32 to vector<8x1xf32>
      %200 = arith.addf %196, %199 : vector<8x1xf32>
      %201 = math.rsqrt %200 : vector<8x1xf32>
      %202 = vector.broadcast %201 : vector<8x1xf32> to vector<8x128xf32>
      %203 = arith.mulf %198, %202 : vector<8x128xf32>
      %204 = vector.shape_cast %183 : vector<128xf32> to vector<1x128xf32>
      %205 = vector.broadcast %204 : vector<1x128xf32> to vector<8x128xf32>
      %206 = arith.mulf %203, %205 : vector<8x128xf32>
      %207 = vector.shape_cast %185 : vector<128xf32> to vector<1x128xf32>
      %208 = vector.broadcast %207 : vector<1x128xf32> to vector<8x128xf32>
      %209 = arith.addf %206, %208 : vector<8x128xf32>
      %210 = vector.shape_cast %209 : vector<8x128xf32> to vector<1x8x128xf32>
      %c0_94 = arith.constant 0 : index
      %c0_95 = arith.constant 0 : index
      %c0_96 = arith.constant 0 : index
      %211 = vector.load %arg19[%c0_94, %c0_95, %c0_96] : memref<1x8x128xf32, #tpu.memory_space<vmem>>, vector<1x8x128xf32>
      tpu.vector_store %arg19[%c0_94, %c0_95, %c0_96], %210 {strides = array<i32>} : memref<1x8x128xf32, #tpu.memory_space<vmem>>, vector<1x8x128xf32>,
    } else {
    }
    return
  }
  func.func @transform_0(%arg0: i32, %arg1: i32) -> (i32, i32, i32) {
    %c0_i32 = arith.constant 0 : i32
    %c0_i32_0 = arith.constant 0 : i32
    %c0_i32_1 = arith.constant 0 : i32
    return %arg0, %c0_i32, %c0_i32_0 : i32, i32, i32
  }
  func.func @transform_1(%arg0: i32, %arg1: i32) -> (i32, i32) {
    %c0_i32 = arith.constant 0 : i32
    %c0_i32_0 = arith.constant 0 : i32
    %c0_i32_1 = arith.constant 0 : i32
    return %c0_i32, %c0_i32_0 : i32, i32
  }
  func.func @transform_2(%arg0: i32, %arg1: i32) -> (i32, i32, i32) {
    %c0_i32 = arith.constant 0 : i32
    %c0_i32_0 = arith.constant 0 : i32
    %c0_i32_1 = arith.constant 0 : i32
    return %arg1, %c0_i32, %c0_i32_0 : i32, i32, i32
  }
  func.func @transform_3(%arg0: i32, %arg1: i32) -> (i32, i32, i32) {
    %c0_i32 = arith.constant 0 : i32
    %c0_i32_0 = arith.constant 0 : i32
    %c0_i32_1 = arith.constant 0 : i32
    return %arg1, %c0_i32, %c0_i32_0 : i32, i32, i32
  }
  func.func @transform_4(%arg0: i32, %arg1: i32) -> (i32, i32, i32) {
    %c0_i32 = arith.constant 0 : i32
    %c0_i32_0 = arith.constant 0 : i32
    %c0_i32_1 = arith.constant 0 : i32
    return %arg1, %c0_i32, %c0_i32_0 : i32, i32, i32
  }
  func.func @transform_5(%arg0: i32, %arg1: i32) -> (i32, i32, i32) {
    %c0_i32 = arith.constant 0 : i32
    %c0_i32_0 = arith.constant 0 : i32
    %c0_i32_1 = arith.constant 0 : i32
    return %arg1, %c0_i32, %c0_i32_0 : i32, i32, i32
  }
  func.func @transform_6(%arg0: i32, %arg1: i32) -> (i32, i32, i32) {
    %c0_i32 = arith.constant 0 : i32
    %c0_i32_0 = arith.constant 0 : i32
    %c0_i32_1 = arith.constant 0 : i32
    return %arg1, %c0_i32, %c0_i32_0 : i32, i32, i32
  }
  func.func @transform_7(%arg0: i32, %arg1: i32) -> (i32, i32, i32) {
    %c0_i32 = arith.constant 0 : i32
    %c0_i32_0 = arith.constant 0 : i32
    %c0_i32_1 = arith.constant 0 : i32
    return %arg1, %c0_i32, %c0_i32_0 : i32, i32, i32
  }
  func.func @transform_8(%arg0: i32, %arg1: i32) -> (i32, i32, i32) {
    %c0_i32 = arith.constant 0 : i32
    %c0_i32_0 = arith.constant 0 : i32
    %c0_i32_1 = arith.constant 0 : i32
    return %arg1, %c0_i32, %c0_i32_0 : i32, i32, i32
  }
  func.func @transform_9(%arg0: i32, %arg1: i32) -> (i32, i32, i32) {
    %c0_i32 = arith.constant 0 : i32
    %c0_i32_0 = arith.constant 0 : i32
    %c0_i32_1 = arith.constant 0 : i32
    return %arg1, %c0_i32, %c0_i32_0 : i32, i32, i32
  }
  func.func @transform_10(%arg0: i32, %arg1: i32) -> (i32, i32, i32) {
    %c0_i32 = arith.constant 0 : i32
    %c0_i32_0 = arith.constant 0 : i32
    %c0_i32_1 = arith.constant 0 : i32
    return %arg1, %c0_i32, %c0_i32_0 : i32, i32, i32
  }
  func.func @transform_11(%arg0: i32, %arg1: i32) -> (i32, i32, i32) {
    %c0_i32 = arith.constant 0 : i32
    %c0_i32_0 = arith.constant 0 : i32
    %c0_i32_1 = arith.constant 0 : i32
    return %arg1, %c0_i32, %c0_i32_0 : i32, i32, i32
  }
  func.func @transform_12(%arg0: i32, %arg1: i32) -> (i32, i32, i32) {
    %c0_i32 = arith.constant 0 : i32
    %c0_i32_0 = arith.constant 0 : i32
    %c0_i32_1 = arith.constant 0 : i32
    return %arg1, %c0_i32, %c0_i32_0 : i32, i32, i32
  }
  func.func @transform_13(%arg0: i32, %arg1: i32) -> (i32, i32, i32) {
    %c0_i32 = arith.constant 0 : i32
    %c0_i32_0 = arith.constant 0 : i32
    %c0_i32_1 = arith.constant 0 : i32
    return %arg1, %c0_i32, %c0_i32_0 : i32, i32, i32
  }
  func.func @transform_14(%arg0: i32, %arg1: i32) -> (i32, i32) {
    %c0_i32 = arith.constant 0 : i32
    %c0_i32_0 = arith.constant 0 : i32
    %c0_i32_1 = arith.constant 0 : i32
    return %c0_i32, %c0_i32_0 : i32, i32
  }
  func.func @transform_15(%arg0: i32, %arg1: i32) -> (i32, i32) {
    %c0_i32 = arith.constant 0 : i32
    %c0_i32_0 = arith.constant 0 : i32
    %c0_i32_1 = arith.constant 0 : i32
    return %c0_i32, %c0_i32_0 : i32, i32
  }
  func.func @transform_16(%arg0: i32, %arg1: i32) -> (i32, i32, i32, i32) {
    %c0_i32 = arith.constant 0 : i32
    %c0_i32_0 = arith.constant 0 : i32
    %c0_i32_1 = arith.constant 0 : i32
    return %arg1, %arg0, %c0_i32, %c0_i32_0 : i32, i32, i32, i32
  }
  func.func @transform_17(%arg0: i32, %arg1: i32) -> (i32, i32, i32) {
    %c0_i32 = arith.constant 0 : i32
    %c0_i32_0 = arith.constant 0 : i32
    %c0_i32_1 = arith.constant 0 : i32
    return %arg0, %c0_i32, %c0_i32_0 : i32, i32, i32
  }
}

</mosaic_0001>

<llo_original>
// kernel: tpu_custom_call.1
$region0: #{tpu_custom_call.1}
  #allocation0 [shape = 'u32[]', space=smem, size = 0x4, offset = 0x4, fixed_abs, tag = 'smem constant byte address 0x4 - core index']
  #allocation1 [shape = 'u32[144,128]{1,0:T(1,128)}', space=vmem, size = 0x12000, scoped, tag = 'internal scratch']
  #allocation2 [shape = 'f32[8,128]{1,0:T(8,128)}', space=vmem, size = 0x1000, scoped, tag = 'scratch operand']
  #allocation3 [shape = 'f32[8,128]{1,0:T(8,128)}', space=vmem, size = 0x1000, scoped, tag = 'scratch operand']
  %s0 = inlined_call_operand.hbm [shape: f32[2,8,128], index: 0, kind: input, shape index: {}]
  %s1 = inlined_call_operand.hbm [shape: f32[8,128], index: 1, kind: input, shape index: {}]
  %s2 = inlined_call_operand.vmem [shape: f32[3,1,128], index: 2, kind: input, shape index: {}]
  %s3 = inlined_call_operand.hbm [shape: f32[3,1,128], index: 3, kind: input, shape index: {}]
  %s4 = inlined_call_operand.hbm [shape: f32[3,128,384], index: 4, kind: input, shape index: {}]
  %s5 = inlined_call_operand.vmem [shape: f32[3,1,384], index: 5, kind: input, shape index: {}]
  %s6 = inlined_call_operand.hbm [shape: f32[3,128,128], index: 6, kind: input, shape index: {}]
  %s7 = inlined_call_operand.vmem [shape: f32[3,1,128], index: 7, kind: input, shape index: {}]
  %s8 = inlined_call_operand.vmem [shape: f32[3,1,128], index: 8, kind: input, shape index: {}]
  %s9 = inlined_call_operand.vmem [shape: f32[3,1,128], index: 9, kind: input, shape index: {}]
  %s10 = inlined_call_operand.hbm [shape: f32[3,128,256], index: 10, kind: input, shape index: {}]
  %s11 = inlined_call_operand.vmem [shape: f32[3,1,256], index: 11, kind: input, shape index: {}]
  %s12 = inlined_call_operand.hbm [shape: f32[3,256,128], index: 12, kind: input, shape index: {}]
  %s13 = inlined_call_operand.vmem [shape: f32[3,1,128], index: 13, kind: input, shape index: {}]
  %s14 = inlined_call_operand.vmem [shape: f32[1,128], index: 14, kind: input, shape index: {}]
  %s15 = inlined_call_operand.vmem [shape: f32[1,128], index: 15, kind: input, shape index: {}]
  %s16 = inlined_call_operand.hbm [shape: f32[3,2,8,128], index: 16, kind: output, shape index: {0}]
  %s17 = inlined_call_operand.hbm [shape: f32[2,8,128], index: 17, kind: output, shape index: {1}]
  %18 = xla_tuple %s16, %s17
  %s19 = sld [smem:[#allocation0]]
  $region141: #{tpu_custom_call.1} parent=0
    _
  %s21 = ssub.s32 1, %s19
  %s22 = scalar_select 0, %s21, %s19
  $region1: #{tpu_custom_call.1} parent=0
    #allocation4 [shape = 'u8[8192]{0}', space=vmem, size = 0x2000, scoped, tag = 'input window, operand 0']
    #allocation5 [shape = 's32[2]{0}', space=sflag, size = 0x8, scoped, tag = 'scoped memory for tpu_custom_call.1']
    #allocation6 [shape = 's32[2]{0}', space=sflag, size = 0x8, scoped, tag = 'scoped memory for tpu_custom_call.1']
    #allocation7 [shape = 'u8[4096]{0}', space=vmem, size = 0x1000, scoped, tag = 'input window, operand 1, single buffered']
    #allocation8 [shape = 's32[1]{0}', space=sflag, size = 0x4, scoped, tag = 'scoped memory for tpu_custom_call.1']
    #allocation9 [shape = 'u8[1024]{0}', space=vmem, size = 0x400, scoped, tag = 'input window, operand 3']
    #allocation10 [shape = 'u8[393216]{0}', space=vmem, size = 0x60000, scoped, tag = 'input window, operand 4']
    #allocation11 [shape = 'u8[131072]{0}', space=vmem, size = 0x20000, scoped, tag = 'input window, operand 6']
    #allocation12 [shape = 'u8[262144]{0}', space=vmem, size = 0x40000, scoped, tag = 'input window, operand 10']
    #allocation13 [shape = 'u8[262144]{0}', space=vmem, size = 0x40000, scoped, tag = 'input window, operand 12']
    #allocation14 [shape = 'u8[8192]{0}', space=vmem, size = 0x2000, scoped, tag = 'output window, operand 0']
    #allocation15 [shape = 'u8[8192]{0}', space=vmem, size = 0x2000, scoped, tag = 'output window, operand 1']
    #allocation16 [shape = 's32[2]{0}', space=sflag, size = 0x8, scoped, tag = 'scoped memory for tpu_custom_call.1']
    %23 = vsyncpa [#allocation5], 0
    %s24 = scalar_lea.sflag [#allocation5], 1
    %25 = vsyncpa %s24, 0
    %26 = vsyncpa [#allocation8], 0
    %27 = vsyncpa [#allocation6], 0
    %s28 = scalar_lea.sflag [#allocation6], 1
    %29 = vsyncpa %s28, 0
    %30 = vsyncpa [#allocation16], 0
    %s31 = scalar_lea.sflag [#allocation16], 1
    %32 = vsyncpa %s31, 0
    loop: start=0, step=1, limit=8
    $region2: #{tpu_custom_call.1} parent=1 // loop_pre_header
      _
    $region3: #{tpu_custom_call.1} parent=1 // loop_header
      %s34 = sphi 0, %s38
      %p35 = scmp.ge.s32.totalorder %s34, 8
      %s41 = sphi 0, %s53
      %s42 = sphi 0, %s49
      %s43 = sphi 0, %s41
      %s44 = sphi 0, %s42
      %s45 = sphi 0, %s43
      %s46 = sphi 0, %s44
      %s56 = sphi 0, %s58
      %s59 = sphi 0, %s56
      %s60 = sphi 0, %s59
      %s76 = sphi 0, %s60
      %s80 = sphi 0, %s80
      %s82 = sphi 0, %s80
      %s83 = sphi 0, %s82
      %s97 = sphi 0, %s83
      %s103 = sphi 0, %s105
      %s106 = sphi 0, %s103
      %s107 = sphi 0, %s106
      %s123 = sphi 0, %s107
      %s129 = sphi 0, %s131
      %s132 = sphi 0, %s129
      %s133 = sphi 0, %s132
      %s149 = sphi 0, %s133
      %s155 = sphi 0, %s157
      %s158 = sphi 0, %s155
      %s159 = sphi 0, %s158
      %s175 = sphi 0, %s159
      %s181 = sphi 0, %s183
      %s184 = sphi 0, %s181
      %s185 = sphi 0, %s184
      %s201 = sphi 0, %s185
      %s207 = sphi 0, %s209
      %s210 = sphi 0, %s207
      %s211 = sphi 0, %s210
      %s227 = sphi 0, %s211
      %s233 = sphi 0, %s235
      %s236 = sphi 0, %s233
      %s237 = sphi 0, %s236
      %s253 = sphi 0, %s237
      %s259 = sphi 0, %s261
      %s262 = sphi 0, %s259
      %s263 = sphi 0, %s262
      %s279 = sphi 0, %s263
      %s285 = sphi 0, %s287
      %s288 = sphi 0, %s285
      %s289 = sphi 0, %s288
      %s305 = sphi 0, %s289
      %s311 = sphi 0, %s313
      %s314 = sphi 0, %s311
      %s315 = sphi 0, %s314
      %s331 = sphi 0, %s315
      %s337 = sphi 0, %s339
      %s340 = sphi 0, %s337
      %s341 = sphi 0, %s340
      %s357 = sphi 0, %s341
      %s363 = sphi 0, %s365
      %s366 = sphi 0, %s363
      %s367 = sphi 0, %s366
      %s383 = sphi 0, %s367
      %s389 = sphi 0, %s391
      %s392 = sphi 0, %s389
      %s393 = sphi 0, %s392
      %s409 = sphi 0, %s393
      %s413 = sphi 0, %s413
      %s415 = sphi 0, %s413
      %s416 = sphi 0, %s415
      %s430 = sphi 0, %s416
      %s434 = sphi 0, %s434
      %s436 = sphi 0, %s434
      %s437 = sphi 0, %s436
      %s451 = sphi 0, %s437
      %s459 = sphi 0, %s461
      %s462 = sphi 0, %s459
      %s463 = sphi 0, %s462
      %s479 = sphi 0, %s463
      %s485 = sphi 0, %s487
      %s488 = sphi 0, %s485
      %s489 = sphi 0, %s488
      %s505 = sphi 0, %s489
    $region4: #{tpu_custom_call.1} parent=1 // loop_header_branch
      %37 = sbr.rel (%p35) target = $region8
    $region5: #{tpu_custom_call.1} parent=1 // loop_body
      %s39 = ssub.s32 %s34, 1
      %s40 = ssub.s32 %s34, 2
      %s47 = sadd.s32 1, %s42
      %p48 = scmp.ge.s32.totalorder %s47, 3
      %s49 = scalar_select %p48, 0, %s47
      %s50 = sadd.s32 1, %s41
      %s51 = scalar_select %p48, %s50, %s41
      %p52 = scmp.ge.s32.totalorder %s51, 2
      %s53 = scalar_select %p52, 0, %s51
      %s54 = ssub.s32 %s41, %s53
      %p55 = scmp.eq.s32.totalorder %s54, 0
      %s57 = sadd.s32 %s56, 1
      %s58 = scalar_select %p55, %s56, %s57
      %p61 = pneg %p55
      %p62 = scmp.eq.s32.totalorder %s34, 5
      %p63 = por %p61, %p62
      %p64 = scmp.ne.s32.totalorder %s56, %s59
      %p65 = scmp.eq.s32.totalorder %s34, 0
      %p66 = por %p64, %p65
      %p67 = scmp.ne.s32.totalorder %s56, %s59
      %p68 = scmp.eq.s32.totalorder %s39, 5
      %p69 = por %p67, %p68
      %p70 = scmp.ne.s32.totalorder %s59, %s60
      %p71 = scmp.eq.s32.totalorder %s39, 0
      %p72 = por %p70, %p71
      %p73 = scmp.ne.s32.totalorder %s59, %s60
      %p74 = scmp.eq.s32.totalorder %s40, 5
      %p75 = por %p73, %p74
      %p77 = scmp.ne.s32.totalorder %s60, %s76
      %p78 = scmp.eq.s32.totalorder %s40, 0
      %p79 = por %p77, %p78
      %s81 = sadd.s32 %s80, 1
      %p84 = scmp.eq.s32.totalorder %s34, 5
      %p85 = scmp.ne.s32.totalorder %s80, %s82
      %p86 = scmp.eq.s32.totalorder %s34, 0
      %p87 = por %p85, %p86
      %p88 = scmp.ne.s32.totalorder %s80, %s82
      %p89 = scmp.eq.s32.totalorder %s39, 5
      %p90 = por %p88, %p89
      %p91 = scmp.ne.s32.totalorder %s82, %s83
      %p92 = scmp.eq.s32.totalorder %s39, 0
      %p93 = por %p91, %p92
      %p94 = scmp.ne.s32.totalorder %s82, %s83
      %p95 = scmp.eq.s32.totalorder %s40, 5
      %p96 = por %p94, %p95
      %p98 = scmp.ne.s32.totalorder %s83, %s97
      %p99 = scmp.eq.s32.totalorder %s40, 0
      %p100 = por %p98, %p99
      %s101 = ssub.s32 %s42, %s49
      %p102 = scmp.eq.s32.totalorder %s101, 0
      %s104 = sadd.s32 %s103, 1
      %s105 = scalar_select %p102, %s103, %s104
      %p108 = pneg %p102
      %p109 = scmp.eq.s32.totalorder %s34, 5
      %p110 = por %p108, %p109
      %p111 = scmp.ne.s32.totalorder %s103, %s106
      %p112 = scmp.eq.s32.totalorder %s34, 0
      %p113 = por %p111, %p112
      %p114 = scmp.ne.s32.totalorder %s103, %s106
      %p115 = scmp.eq.s32.totalorder %s39, 5
      %p116 = por %p114, %p115
      %p117 = scmp.ne.s32.totalorder %s106, %s107
      %p118 = scmp.eq.s32.totalorder %s39, 0
      %p119 = por %p117, %p118
      %p120 = scmp.ne.s32.totalorder %s106, %s107
      %p121 = scmp.eq.s32.totalorder %s40, 5
      %p122 = por %p120, %p121
      %p124 = scmp.ne.s32.totalorder %s107, %s123
      %p125 = scmp.eq.s32.totalorder %s40, 0
      %p126 = por %p124, %p125
      %s127 = ssub.s32 %s42, %s49
      %p128 = scmp.eq.s32.totalorder %s127, 0
      %s130 = sadd.s32 %s129, 1
      %s131 = scalar_select %p128, %s129, %s130
      %p134 = pneg %p128
      %p135 = scmp.eq.s32.totalorder %s34, 5
      %p136 = por %p134, %p135
      %p137 = scmp.ne.s32.totalorder %s129, %s132
      %p138 = scmp.eq.s32.totalorder %s34, 0
      %p139 = por %p137, %p138
      %p140 = scmp.ne.s32.totalorder %s129, %s132
      %p141 = scmp.eq.s32.totalorder %s39, 5
      %p142 = por %p140, %p141
      %p143 = scmp.ne.s32.totalorder %s132, %s133
      %p144 = scmp.eq.s32.totalorder %s39, 0
      %p145 = por %p143, %p144
      %p146 = scmp.ne.s32.totalorder %s132, %s133
      %p147 = scmp.eq.s32.totalorder %s40, 5
      %p148 = por %p146, %p147
      %p150 = scmp.ne.s32.totalorder %s133, %s149
      %p151 = scmp.eq.s32.totalorder %s40, 0
      %p152 = por %p150, %p151
      %s153 = ssub.s32 %s42, %s49
      %p154 = scmp.eq.s32.totalorder %s153, 0
      %s156 = sadd.s32 %s155, 1
      %s157 = scalar_select %p154, %s155, %s156
      %p160 = pneg %p154
      %p161 = scmp.eq.s32.totalorder %s34, 5
      %p162 = por %p160, %p161
      %p163 = scmp.ne.s32.totalorder %s155, %s158
      %p164 = scmp.eq.s32.totalorder %s34, 0
      %p165 = por %p163, %p164
      %p166 = scmp.ne.s32.totalorder %s155, %s158
      %p167 = scmp.eq.s32.totalorder %s39, 5
      %p168 = por %p166, %p167
      %p169 = scmp.ne.s32.totalorder %s158, %s159
      %p170 = scmp.eq.s32.totalorder %s39, 0
      %p171 = por %p169, %p170
      %p172 = scmp.ne.s32.totalorder %s158, %s159
      %p173 = scmp.eq.s32.totalorder %s40, 5
      %p174 = por %p172, %p173
      %p176 = scmp.ne.s32.totalorder %s159, %s175
      %p177 = scmp.eq.s32.totalorder %s40, 0
      %p178 = por %p176, %p177
      %s179 = ssub.s32 %s42, %s49
      %p180 = scmp.eq.s32.totalorder %s179, 0
      %s182 = sadd.s32 %s181, 1
      %s183 = scalar_select %p180, %s181, %s182
      %p186 = pneg %p180
      %p187 = scmp.eq.s32.totalorder %s34, 5
      %p188 = por %p186, %p187
      %p189 = scmp.ne.s32.totalorder %s181, %s184
      %p190 = scmp.eq.s32.totalorder %s34, 0
      %p191 = por %p189, %p190
      %p192 = scmp.ne.s32.totalorder %s181, %s184
      %p193 = scmp.eq.s32.totalorder %s39, 5
      %p194 = por %p192, %p193
      %p195 = scmp.ne.s32.totalorder %s184, %s185
      %p196 = scmp.eq.s32.totalorder %s39, 0
      %p197 = por %p195, %p196
      %p198 = scmp.ne.s32.totalorder %s184, %s185
      %p199 = scmp.eq.s32.totalorder %s40, 5
      %p200 = por %p198, %p199
      %p202 = scmp.ne.s32.totalorder %s185, %s201
      %p203 = scmp.eq.s32.totalorder %s40, 0
      %p204 = por %p202, %p203
      %s205 = ssub.s32 %s42, %s49
      %p206 = scmp.eq.s32.totalorder %s205, 0
      %s208 = sadd.s32 %s207, 1
      %s209 = scalar_select %p206, %s207, %s208
      %p212 = pneg %p206
      %p213 = scmp.eq.s32.totalorder %s34, 5
      %p214 = por %p212, %p213
      %p215 = scmp.ne.s32.totalorder %s207, %s210
      %p216 = scmp.eq.s32.totalorder %s34, 0
      %p217 = por %p215, %p216
      %p218 = scmp.ne.s32.totalorder %s207, %s210
      %p219 = scmp.eq.s32.totalorder %s39, 5
      %p220 = por %p218, %p219
      %p221 = scmp.ne.s32.totalorder %s210, %s211
      %p222 = scmp.eq.s32.totalorder %s39, 0
      %p223 = por %p221, %p222
      %p224 = scmp.ne.s32.totalorder %s210, %s211
      %p225 = scmp.eq.s32.totalorder %s40, 5
      %p226 = por %p224, %p225
      %p228 = scmp.ne.s32.totalorder %s211, %s227
      %p229 = scmp.eq.s32.totalorder %s40, 0
      %p230 = por %p228, %p229
      %s231 = ssub.s32 %s42, %s49
      %p232 = scmp.eq.s32.totalorder %s231, 0
      %s234 = sadd.s32 %s233, 1
      %s235 = scalar_select %p232, %s233, %s234
      %p238 = pneg %p232
      %p239 = scmp.eq.s32.totalorder %s34, 5
      %p240 = por %p238, %p239
      %p241 = scmp.ne.s32.totalorder %s233, %s236
      %p242 = scmp.eq.s32.totalorder %s34, 0
      %p243 = por %p241, %p242
      %p244 = scmp.ne.s32.totalorder %s233, %s236
      %p245 = scmp.eq.s32.totalorder %s39, 5
      %p246 = por %p244, %p245
      %p247 = scmp.ne.s32.totalorder %s236, %s237
      %p248 = scmp.eq.s32.totalorder %s39, 0
      %p249 = por %p247, %p248
      %p250 = scmp.ne.s32.totalorder %s236, %s237
      %p251 = scmp.eq.s32.totalorder %s40, 5
      %p252 = por %p250, %p251
      %p254 = scmp.ne.s32.totalorder %s237, %s253
      %p255 = scmp.eq.s32.totalorder %s40, 0
      %p256 = por %p254, %p255
      %s257 = ssub.s32 %s42, %s49
      %p258 = scmp.eq.s32.totalorder %s257, 0
      %s260 = sadd.s32 %s259, 1
      %s261 = scalar_select %p258, %s259, %s260
      %p264 = pneg %p258
      %p265 = scmp.eq.s32.totalorder %s34, 5
      %p266 = por %p264, %p265
      %p267 = scmp.ne.s32.totalorder %s259, %s262
      %p268 = scmp.eq.s32.totalorder %s34, 0
      %p269 = por %p267, %p268
      %p270 = scmp.ne.s32.totalorder %s259, %s262
      %p271 = scmp.eq.s32.totalorder %s39, 5
      %p272 = por %p270, %p271
      %p273 = scmp.ne.s32.totalorder %s262, %s263
      %p274 = scmp.eq.s32.totalorder %s39, 0
      %p275 = por %p273, %p274
      %p276 = scmp.ne.s32.totalorder %s262, %s263
      %p277 = scmp.eq.s32.totalorder %s40, 5
      %p278 = por %p276, %p277
      %p280 = scmp.ne.s32.totalorder %s263, %s279
      %p281 = scmp.eq.s32.totalorder %s40, 0
      %p282 = por %p280, %p281
      %s283 = ssub.s32 %s42, %s49
      %p284 = scmp.eq.s32.totalorder %s283, 0
      %s286 = sadd.s32 %s285, 1
      %s287 = scalar_select %p284, %s285, %s286
      %p290 = pneg %p284
      %p291 = scmp.eq.s32.totalorder %s34, 5
      %p292 = por %p290, %p291
      %p293 = scmp.ne.s32.totalorder %s285, %s288
      %p294 = scmp.eq.s32.totalorder %s34, 0
      %p295 = por %p293, %p294
      %p296 = scmp.ne.s32.totalorder %s285, %s288
      %p297 = scmp.eq.s32.totalorder %s39, 5
      %p298 = por %p296, %p297
      %p299 = scmp.ne.s32.totalorder %s288, %s289
      %p300 = scmp.eq.s32.totalorder %s39, 0
      %p301 = por %p299, %p300
      %p302 = scmp.ne.s32.totalorder %s288, %s289
      %p303 = scmp.eq.s32.totalorder %s40, 5
      %p304 = por %p302, %p303
      %p306 = scmp.ne.s32.totalorder %s289, %s305
      %p307 = scmp.eq.s32.totalorder %s40, 0
      %p308 = por %p306, %p307
      %s309 = ssub.s32 %s42, %s49
      %p310 = scmp.eq.s32.totalorder %s309, 0
      %s312 = sadd.s32 %s311, 1
      %s313 = scalar_select %p310, %s311, %s312
      %p316 = pneg %p310
      %p317 = scmp.eq.s32.totalorder %s34, 5
      %p318 = por %p316, %p317
      %p319 = scmp.ne.s32.totalorder %s311, %s314
      %p320 = scmp.eq.s32.totalorder %s34, 0
      %p321 = por %p319, %p320
      %p322 = scmp.ne.s32.totalorder %s311, %s314
      %p323 = scmp.eq.s32.totalorder %s39, 5
      %p324 = por %p322, %p323
      %p325 = scmp.ne.s32.totalorder %s314, %s315
      %p326 = scmp.eq.s32.totalorder %s39, 0
      %p327 = por %p325, %p326
      %p328 = scmp.ne.s32.totalorder %s314, %s315
      %p329 = scmp.eq.s32.totalorder %s40, 5
      %p330 = por %p328, %p329
      %p332 = scmp.ne.s32.totalorder %s315, %s331
      %p333 = scmp.eq.s32.totalorder %s40, 0
      %p334 = por %p332, %p333
      %s335 = ssub.s32 %s42, %s49
      %p336 = scmp.eq.s32.totalorder %s335, 0
      %s338 = sadd.s32 %s337, 1
      %s339 = scalar_select %p336, %s337, %s338
      %p342 = pneg %p336
      %p343 = scmp.eq.s32.totalorder %s34, 5
      %p344 = por %p342, %p343
      %p345 = scmp.ne.s32.totalorder %s337, %s340
      %p346 = scmp.eq.s32.totalorder %s34, 0
      %p347 = por %p345, %p346
      %p348 = scmp.ne.s32.totalorder %s337, %s340
      %p349 = scmp.eq.s32.totalorder %s39, 5
      %p350 = por %p348, %p349
      %p351 = scmp.ne.s32.totalorder %s340, %s341
      %p352 = scmp.eq.s32.totalorder %s39, 0
      %p353 = por %p351, %p352
      %p354 = scmp.ne.s32.totalorder %s340, %s341
      %p355 = scmp.eq.s32.totalorder %s40, 5
      %p356 = por %p354, %p355
      %p358 = scmp.ne.s32.totalorder %s341, %s357
      %p359 = scmp.eq.s32.totalorder %s40, 0
      %p360 = por %p358, %p359
      %s361 = ssub.s32 %s42, %s49
      %p362 = scmp.eq.s32.totalorder %s361, 0
      %s364 = sadd.s32 %s363, 1
      %s365 = scalar_select %p362, %s363, %s364
      %p368 = pneg %p362
      %p369 = scmp.eq.s32.totalorder %s34, 5
      %p370 = por %p368, %p369
      %p371 = scmp.ne.s32.totalorder %s363, %s366
      %p372 = scmp.eq.s32.totalorder %s34, 0
      %p373 = por %p371, %p372
      %p374 = scmp.ne.s32.totalorder %s363, %s366
      %p375 = scmp.eq.s32.totalorder %s39, 5
      %p376 = por %p374, %p375
      %p377 = scmp.ne.s32.totalorder %s366, %s367
      %p378 = scmp.eq.s32.totalorder %s39, 0
      %p379 = por %p377, %p378
      %p380 = scmp.ne.s32.totalorder %s366, %s367
      %p381 = scmp.eq.s32.totalorder %s40, 5
      %p382 = por %p380, %p381
      %p384 = scmp.ne.s32.totalorder %s367, %s383
      %p385 = scmp.eq.s32.totalorder %s40, 0
      %p386 = por %p384, %p385
      %s387 = ssub.s32 %s42, %s49
      %p388 = scmp.eq.s32.totalorder %s387, 0
      %s390 = sadd.s32 %s389, 1
      %s391 = scalar_select %p388, %s389, %s390
      %p394 = pneg %p388
      %p395 = scmp.eq.s32.totalorder %s34, 5
      %p396 = por %p394, %p395
      %p397 = scmp.ne.s32.totalorder %s389, %s392
      %p398 = scmp.eq.s32.totalorder %s34, 0
      %p399 = por %p397, %p398
      %p400 = scmp.ne.s32.totalorder %s389, %s392
      %p401 = scmp.eq.s32.totalorder %s39, 5
      %p402 = por %p400, %p401
      %p403 = scmp.ne.s32.totalorder %s392, %s393
      %p404 = scmp.eq.s32.totalorder %s39, 0
      %p405 = por %p403, %p404
      %p406 = scmp.ne.s32.totalorder %s392, %s393
      %p407 = scmp.eq.s32.totalorder %s40, 5
      %p408 = por %p406, %p407
      %p410 = scmp.ne.s32.totalorder %s393, %s409
      %p411 = scmp.eq.s32.totalorder %s40, 0
      %p412 = por %p410, %p411
      %s414 = sadd.s32 %s413, 1
      %p417 = scmp.eq.s32.totalorder %s34, 5
      %p418 = scmp.ne.s32.totalorder %s413, %s415
      %p419 = scmp.eq.s32.totalorder %s34, 0
      %p420 = por %p418, %p419
      %p421 = scmp.ne.s32.totalorder %s413, %s415
      %p422 = scmp.eq.s32.totalorder %s39, 5
      %p423 = por %p421, %p422
      %p424 = scmp.ne.s32.totalorder %s415, %s416
      %p425 = scmp.eq.s32.totalorder %s39, 0
      %p426 = por %p424, %p425
      %p427 = scmp.ne.s32.totalorder %s415, %s416
      %p428 = scmp.eq.s32.totalorder %s40, 5
      %p429 = por %p427, %p428
      %p431 = scmp.ne.s32.totalorder %s416, %s430
      %p432 = scmp.eq.s32.totalorder %s40, 0
      %p433 = por %p431, %p432
      %s435 = sadd.s32 %s434, 1
      %p438 = scmp.eq.s32.totalorder %s34, 5
      %p439 = scmp.ne.s32.totalorder %s434, %s436
      %p440 = scmp.eq.s32.totalorder %s34, 0
      %p441 = por %p439, %p440
      %p442 = scmp.ne.s32.totalorder %s434, %s436
      %p443 = scmp.eq.s32.totalorder %s39, 5
      %p444 = por %p442, %p443
      %p445 = scmp.ne.s32.totalorder %s436, %s437
      %p446 = scmp.eq.s32.totalorder %s39, 0
      %p447 = por %p445, %p446
      %p448 = scmp.ne.s32.totalorder %s436, %s437
      %p449 = scmp.eq.s32.totalorder %s40, 5
      %p450 = por %p448, %p449
      %p452 = scmp.ne.s32.totalorder %s437, %s451
      %p453 = scmp.eq.s32.totalorder %s40, 0
      %p454 = por %p452, %p453
      %s455 = ssub.s32 %s42, %s49
      %s456 = ssub.s32 %s41, %s53
      %s457 = sor.u32 %s455, %s456
      %p458 = scmp.eq.s32.totalorder %s457, 0
      %s460 = sadd.s32 %s459, 1
      %s461 = scalar_select %p458, %s459, %s460
      %p464 = pneg %p458
      %p465 = scmp.eq.s32.totalorder %s34, 5
      %p466 = por %p464, %p465
      %p467 = scmp.ne.s32.totalorder %s459, %s462
      %p468 = scmp.eq.s32.totalorder %s34, 0
      %p469 = por %p467, %p468
      %p470 = scmp.ne.s32.totalorder %s459, %s462
      %p471 = scmp.eq.s32.totalorder %s39, 5
      %p472 = por %p470, %p471
      %p473 = scmp.ne.s32.totalorder %s462, %s463
      %p474 = scmp.eq.s32.totalorder %s39, 0
      %p475 = por %p473, %p474
      %p476 = scmp.ne.s32.totalorder %s462, %s463
      %p477 = scmp.eq.s32.totalorder %s40, 5
      %p478 = por %p476, %p477
      %p480 = scmp.ne.s32.totalorder %s463, %s479
      %p481 = scmp.eq.s32.totalorder %s40, 0
      %p482 = por %p480, %p481
      %s483 = ssub.s32 %s41, %s53
      %p484 = scmp.eq.s32.totalorder %s483, 0
      %s486 = sadd.s32 %s485, 1
      %s487 = scalar_select %p484, %s485, %s486
      %p490 = pneg %p484
      %p491 = scmp.eq.s32.totalorder %s34, 5
      %p492 = por %p490, %p491
      %p493 = scmp.ne.s32.totalorder %s485, %s488
      %p494 = scmp.eq.s32.totalorder %s34, 0
      %p495 = por %p493, %p494
      %p496 = scmp.ne.s32.totalorder %s485, %s488
      %p497 = scmp.eq.s32.totalorder %s39, 5
      %p498 = por %p496, %p497
      %p499 = scmp.ne.s32.totalorder %s488, %s489
      %p500 = scmp.eq.s32.totalorder %s39, 0
      %p501 = por %p499, %p500
      %p502 = scmp.ne.s32.totalorder %s488, %s489
      %p503 = scmp.eq.s32.totalorder %s40, 5
      %p504 = por %p502, %p503
      %p506 = scmp.ne.s32.totalorder %s489, %s505
      %p507 = scmp.eq.s32.totalorder %s40, 0
      %p508 = por %p506, %p507
      %p509 = scmp.le.s32.totalorder 1, %s34
      %p510 = scmp.lt.s32.totalorder %s34, 7
      %p511 = pnand %p509, %p510
      %p512 = pneg %p511
      // Predicated region
      $region9: #{tpu_custom_call.1} parent=5 // pred_check
        _
      $region10: #{tpu_custom_call.1} parent=5 // pred_check_branch
        %514 = sbr.rel (%p511) target = $region12
      $region11: #{tpu_custom_call.1} parent=5 // pred_region
        %s515 = ssub.s32 %s34, 1
        // Predicated region
        $region13: #{tpu_custom_call.1} parent=11 // pred_check
          %p516 = pneg %p93
        $region14: #{tpu_custom_call.1} parent=11 // pred_check_branch
          %518 = sbr.rel (%p516) target = $region16
        $region15: #{tpu_custom_call.1} parent=11 // pred_region
          %s520 = ssub.s32 128, 128
          %521 = vsyncadd [#allocation8], %s520
          %s523 = sshll.u32 [#allocation7], 4
          %s524 = int_to_ptr.vmem [resolvable:$true] %s523
          %526 = dma.hbm_to_vmem [thread:$0]  %s1, 128, %s524, [#allocation8]
        $region16: #{tpu_custom_call.1} parent=11 // pred_fallthru
          _
        // Predicated region
        $region17: #{tpu_custom_call.1} parent=11 // pred_check
          %p527 = pneg %p426
        $region18: #{tpu_custom_call.1} parent=11 // pred_check_branch
          %529 = sbr.rel (%p527) target = $region20
        $region19: #{tpu_custom_call.1} parent=11 // pred_region
          _
        $region20: #{tpu_custom_call.1} parent=11 // pred_fallthru
          _
        // Predicated region
        $region21: #{tpu_custom_call.1} parent=11 // pred_check
          %p530 = pneg %p447
        $region22: #{tpu_custom_call.1} parent=11 // pred_check_branch
          %532 = sbr.rel (%p530) target = $region24
        $region23: #{tpu_custom_call.1} parent=11 // pred_region
          _
        $region24: #{tpu_custom_call.1} parent=11 // pred_fallthru
          _
      $region12: #{tpu_custom_call.1} parent=5 // pred_fallthru
        _
      %p533 = scmp.lt.s32.totalorder %s34, 6
      // Predicated region
      $region25: #{tpu_custom_call.1} parent=5 // pred_check
        %p534 = pneg %p533
      $region26: #{tpu_custom_call.1} parent=5 // pred_check_branch
        %536 = sbr.rel (%p534) target = $region28
      $region27: #{tpu_custom_call.1} parent=5 // pred_region
        // Predicated region
        $region29: #{tpu_custom_call.1} parent=27 // pred_check
          %p537 = pneg %p66
        $region30: #{tpu_custom_call.1} parent=27 // pred_check_branch
          %539 = sbr.rel (%p537) target = $region32
        $region31: #{tpu_custom_call.1} parent=27 // pred_region
          %s540 = sand.u32 %s34, 1
          %s541 = scalar_lea.sflag [#allocation5], %s540
          %s542 = sand.u32 %s56, 1
          %s543 = smul.addr %s542, 8
          %s544 = scalar_lea.vmem [#allocation4], %s543
          %s546 = ssub.s32 128, 128
          %547 = vsyncadd %s541, %s546
          %s548 = smul.addr %s41, 128
          %s549 = scalar_lea.hbm %s0, %s548
          %s551 = sshll.u32 %s544, 4
          %s552 = int_to_ptr.vmem [resolvable:$true] %s551
          %554 = dma.hbm_to_vmem [thread:$0]  %s549, 128, %s552, %s541
        $region32: #{tpu_custom_call.1} parent=27 // pred_fallthru
          _
        // Predicated region
        $region33: #{tpu_custom_call.1} parent=27 // pred_check
          %p555 = pneg %p113
        $region34: #{tpu_custom_call.1} parent=27 // pred_check_branch
          %557 = sbr.rel (%p555) target = $region36
        $region35: #{tpu_custom_call.1} parent=27 // pred_region
          %p558 = scmp.lt.s32.totalorder %s42, 2
          %s559 = scalar_select %p558, %s42, 2
          %s560 = scalar_lea.vmem %s2, %s559
        $region36: #{tpu_custom_call.1} parent=27 // pred_fallthru
          _
        // Predicated region
        $region37: #{tpu_custom_call.1} parent=27 // pred_check
          %p561 = pneg %p139
        $region38: #{tpu_custom_call.1} parent=27 // pred_check_branch
          %563 = sbr.rel (%p561) target = $region40
        $region39: #{tpu_custom_call.1} parent=27 // pred_region
          %s564 = sand.u32 %s34, 1
          %s565 = scalar_lea.sflag [#allocation5], %s564
          %s566 = sand.u32 %s129, 1
          %s567 = scalar_lea.vmem [#allocation9], %s566
          %s569 = ssub.s32 16, 16
          %570 = vsyncadd %s565, %s569
          %s571 = smul.addr %s42, 16
          %s572 = scalar_lea.hbm %s3, %s571
          %s574 = sshll.u32 %s567, 4
          %s575 = int_to_ptr.vmem [resolvable:$true] %s574
          %577 = dma.hbm_to_vmem [thread:$0]  %s572, 16, %s575, %s565
        $region40: #{tpu_custom_call.1} parent=27 // pred_fallthru
          _
        // Predicated region
        $region41: #{tpu_custom_call.1} parent=27 // pred_check
          %p578 = pneg %p165
        $region42: #{tpu_custom_call.1} parent=27 // pred_check_branch
          %580 = sbr.rel (%p578) target = $region44
        $region43: #{tpu_custom_call.1} parent=27 // pred_region
          %s581 = sand.u32 %s34, 1
          %s582 = scalar_lea.sflag [#allocation5], %s581
          %s583 = sand.u32 %s155, 1
          %s584 = smul.addr %s583, 384
          %s585 = scalar_lea.vmem [#allocation10], %s584
          %s587 = ssub.s32 6144, 6144
          %588 = vsyncadd %s582, %s587
          %s589 = smul.addr %s42, 48
          %s590 = smul.addr %s589, 128
          %s591 = scalar_lea.hbm %s4, %s590
          %s592 = sshll.u32 %s585, 4
          %s593 = int_to_ptr.vmem [resolvable:$true] %s592
          %598 = dma.hbm_to_vmem [thread:$0]  %s591, 6144, %s593, %s582, 384, 384, 24
        $region44: #{tpu_custom_call.1} parent=27 // pred_fallthru
          _
        // Predicated region
        $region45: #{tpu_custom_call.1} parent=27 // pred_check
          %p599 = pneg %p191
        $region46: #{tpu_custom_call.1} parent=27 // pred_check_branch
          %601 = sbr.rel (%p599) target = $region48
        $region47: #{tpu_custom_call.1} parent=27 // pred_region
          %p602 = scmp.lt.s32.totalorder %s42, 2
          %s603 = scalar_select %p602, %s42, 2
          %s604 = smul.addr %s603, 3
          %s605 = scalar_lea.vmem %s5, %s604
        $region48: #{tpu_custom_call.1} parent=27 // pred_fallthru
          _
        // Predicated region
        $region49: #{tpu_custom_call.1} parent=27 // pred_check
          %p606 = pneg %p217
        $region50: #{tpu_custom_call.1} parent=27 // pred_check_branch
          %608 = sbr.rel (%p606) target = $region52
        $region51: #{tpu_custom_call.1} parent=27 // pred_region
          %s609 = sand.u32 %s34, 1
          %s610 = scalar_lea.sflag [#allocation5], %s609
          %s611 = sand.u32 %s207, 1
          %s612 = smul.addr %s611, 128
          %s613 = scalar_lea.vmem [#allocation11], %s612
          %s615 = ssub.s32 2048, 2048
          %616 = vsyncadd %s610, %s615
          %s617 = smul.addr %s42, 16
          %s618 = smul.addr %s617, 128
          %s619 = scalar_lea.hbm %s6, %s618
          %s620 = sshll.u32 %s613, 4
          %s621 = int_to_ptr.vmem [resolvable:$true] %s620
          %626 = dma.hbm_to_vmem [thread:$0]  %s619, 2048, %s621, %s610, 128, 128, 8
        $region52: #{tpu_custom_call.1} parent=27 // pred_fallthru
          _
        // Predicated region
        $region53: #{tpu_custom_call.1} parent=27 // pred_check
          %p627 = pneg %p243
        $region54: #{tpu_custom_call.1} parent=27 // pred_check_branch
          %629 = sbr.rel (%p627) target = $region56
        $region55: #{tpu_custom_call.1} parent=27 // pred_region
          %p630 = scmp.lt.s32.totalorder %s42, 2
          %s631 = scalar_select %p630, %s42, 2
          %s632 = scalar_lea.vmem %s7, %s631
        $region56: #{tpu_custom_call.1} parent=27 // pred_fallthru
          _
        // Predicated region
        $region57: #{tpu_custom_call.1} parent=27 // pred_check
          %p633 = pneg %p269
        $region58: #{tpu_custom_call.1} parent=27 // pred_check_branch
          %635 = sbr.rel (%p633) target = $region60
        $region59: #{tpu_custom_call.1} parent=27 // pred_region
          %p636 = scmp.lt.s32.totalorder %s42, 2
          %s637 = scalar_select %p636, %s42, 2
          %s638 = scalar_lea.vmem %s8, %s637
        $region60: #{tpu_custom_call.1} parent=27 // pred_fallthru
          _
        // Predicated region
        $region61: #{tpu_custom_call.1} parent=27 // pred_check
          %p639 = pneg %p295
        $region62: #{tpu_custom_call.1} parent=27 // pred_check_branch
          %641 = sbr.rel (%p639) target = $region64
        $region63: #{tpu_custom_call.1} parent=27 // pred_region
          %p642 = scmp.lt.s32.totalorder %s42, 2
          %s643 = scalar_select %p642, %s42, 2
          %s644 = scalar_lea.vmem %s9, %s643
        $region64: #{tpu_custom_call.1} parent=27 // pred_fallthru
          _
        // Predicated region
        $region65: #{tpu_custom_call.1} parent=27 // pred_check
          %p645 = pneg %p321
        $region66: #{tpu_custom_call.1} parent=27 // pred_check_branch
          %647 = sbr.rel (%p645) target = $region68
        $region67: #{tpu_custom_call.1} parent=27 // pred_region
          %s648 = sand.u32 %s34, 1
          %s649 = scalar_lea.sflag [#allocation5], %s648
          %s650 = sand.u32 %s311, 1
          %s651 = smul.addr %s650, 256
          %s652 = scalar_lea.vmem [#allocation12], %s651
          %s654 = ssub.s32 4096, 4096
          %655 = vsyncadd %s649, %s654
          %s656 = smul.addr %s42, 32
          %s657 = smul.addr %s656, 128
          %s658 = scalar_lea.hbm %s10, %s657
          %s659 = sshll.u32 %s652, 4
          %s660 = int_to_ptr.vmem [resolvable:$true] %s659
          %665 = dma.hbm_to_vmem [thread:$0]  %s658, 4096, %s660, %s649, 256, 256, 16
        $region68: #{tpu_custom_call.1} parent=27 // pred_fallthru
          _
        // Predicated region
        $region69: #{tpu_custom_call.1} parent=27 // pred_check
          %p666 = pneg %p347
        $region70: #{tpu_custom_call.1} parent=27 // pred_check_branch
          %668 = sbr.rel (%p666) target = $region72
        $region71: #{tpu_custom_call.1} parent=27 // pred_region
          %p669 = scmp.lt.s32.totalorder %s42, 2
          %s670 = scalar_select %p669, %s42, 2
          %s671 = smul.addr %s670, 2
          %s672 = scalar_lea.vmem %s11, %s671
        $region72: #{tpu_custom_call.1} parent=27 // pred_fallthru
          _
        // Predicated region
        $region73: #{tpu_custom_call.1} parent=27 // pred_check
          %p673 = pneg %p373
        $region74: #{tpu_custom_call.1} parent=27 // pred_check_branch
          %675 = sbr.rel (%p673) target = $region76
        $region75: #{tpu_custom_call.1} parent=27 // pred_region
          %s676 = sand.u32 %s34, 1
          %s677 = scalar_lea.sflag [#allocation5], %s676
          %s678 = sand.u32 %s363, 1
          %s679 = smul.addr %s678, 256
          %s680 = scalar_lea.vmem [#allocation13], %s679
          %s682 = ssub.s32 4096, 4096
          %683 = vsyncadd %s677, %s682
          %s684 = smul.addr %s42, 32
          %s685 = smul.addr %s684, 128
          %s686 = scalar_lea.hbm %s12, %s685
          %s687 = sshll.u32 %s680, 4
          %s688 = int_to_ptr.vmem [resolvable:$true] %s687
          %693 = dma.hbm_to_vmem [thread:$0]  %s686, 4096, %s688, %s677, 128, 128, 8
        $region76: #{tpu_custom_call.1} parent=27 // pred_fallthru
          _
        // Predicated region
        $region77: #{tpu_custom_call.1} parent=27 // pred_check
          %p694 = pneg %p399
        $region78: #{tpu_custom_call.1} parent=27 // pred_check_branch
          %696 = sbr.rel (%p694) target = $region80
        $region79: #{tpu_custom_call.1} parent=27 // pred_region
          %p697 = scmp.lt.s32.totalorder %s42, 2
          %s698 = scalar_select %p697, %s42, 2
          %s699 = scalar_lea.vmem %s13, %s698
        $region80: #{tpu_custom_call.1} parent=27 // pred_fallthru
          _
      $region28: #{tpu_custom_call.1} parent=5 // pred_fallthru
        _
      %p700 = scmp.le.s32.totalorder 1, %s34
      %p701 = scmp.lt.s32.totalorder %s34, 7
      %p702 = pnand %p700, %p701
      %p703 = pneg %p702
      // Predicated region
      $region81: #{tpu_custom_call.1} parent=5 // pred_check
        _
      $region82: #{tpu_custom_call.1} parent=5 // pred_check_branch
        %705 = sbr.rel (%p702) target = $region84
      $region83: #{tpu_custom_call.1} parent=5 // pred_region
        %s706 = ssub.s32 %s34, 1
        %s707 = sand.u32 %s39, 1
        %s708 = scalar_lea.sflag [#allocation5], %s707
        %s709 = sand.u32 %s59, 1
        %s710 = smul.addr %s709, 8
        %s711 = scalar_lea.vmem [#allocation4], %s710
        // Predicated region
        $region85: #{tpu_custom_call.1} parent=83 // pred_check
          %p712 = pneg %p72
        $region86: #{tpu_custom_call.1} parent=83 // pred_check_branch
          %714 = sbr.rel (%p712) target = $region88
        $region87: #{tpu_custom_call.1} parent=83 // pred_region
          %715 = dma.done %s708, 128
        $region88: #{tpu_custom_call.1} parent=83 // pred_fallthru
          _
        // Predicated region
        $region89: #{tpu_custom_call.1} parent=83 // pred_check
          %p716 = pneg %p93
        $region90: #{tpu_custom_call.1} parent=83 // pred_check_branch
          %718 = sbr.rel (%p716) target = $region92
        $region91: #{tpu_custom_call.1} parent=83 // pred_region
          %719 = dma.done [#allocation8], 128
        $region92: #{tpu_custom_call.1} parent=83 // pred_fallthru
          _
        %s720 = sand.u32 %s39, 1
        %s721 = scalar_lea.sflag [#allocation5], %s720
        %s722 = sand.u32 %s132, 1
        %s723 = scalar_lea.vmem [#allocation9], %s722
        // Predicated region
        $region93: #{tpu_custom_call.1} parent=83 // pred_check
          %p724 = pneg %p145
        $region94: #{tpu_custom_call.1} parent=83 // pred_check_branch
          %726 = sbr.rel (%p724) target = $region96
        $region95: #{tpu_custom_call.1} parent=83 // pred_region
          %727 = dma.done %s721, 16
        $region96: #{tpu_custom_call.1} parent=83 // pred_fallthru
          _
        %s728 = sand.u32 %s39, 1
        %s729 = scalar_lea.sflag [#allocation5], %s728
        %s730 = sand.u32 %s158, 1
        %s731 = smul.addr %s730, 384
        %s732 = scalar_lea.vmem [#allocation10], %s731
        // Predicated region
        $region97: #{tpu_custom_call.1} parent=83 // pred_check
          %p733 = pneg %p171
        $region98: #{tpu_custom_call.1} parent=83 // pred_check_branch
          %735 = sbr.rel (%p733) target = $region100
        $region99: #{tpu_custom_call.1} parent=83 // pred_region
          %736 = dma.done %s729, 6144
        $region100: #{tpu_custom_call.1} parent=83 // pred_fallthru
          _
        %s737 = sand.u32 %s39, 1
        %s738 = scalar_lea.sflag [#allocation5], %s737
        %s739 = sand.u32 %s210, 1
        %s740 = smul.addr %s739, 128
        %s741 = scalar_lea.vmem [#allocation11], %s740
        // Predicated region
        $region101: #{tpu_custom_call.1} parent=83 // pred_check
          %p742 = pneg %p223
        $region102: #{tpu_custom_call.1} parent=83 // pred_check_branch
          %744 = sbr.rel (%p742) target = $region104
        $region103: #{tpu_custom_call.1} parent=83 // pred_region
          %745 = dma.done %s738, 2048
        $region104: #{tpu_custom_call.1} parent=83 // pred_fallthru
          _
        %s746 = sand.u32 %s39, 1
        %s747 = scalar_lea.sflag [#allocation5], %s746
        %s748 = sand.u32 %s314, 1
        %s749 = smul.addr %s748, 256
        %s750 = scalar_lea.vmem [#allocation12], %s749
        // Predicated region
        $region105: #{tpu_custom_call.1} parent=83 // pred_check
          %p751 = pneg %p327
        $region106: #{tpu_custom_call.1} parent=83 // pred_check_branch
          %753 = sbr.rel (%p751) target = $region108
        $region107: #{tpu_custom_call.1} parent=83 // pred_region
          %754 = dma.done %s747, 4096
        $region108: #{tpu_custom_call.1} parent=83 // pred_fallthru
          _
        %s755 = sand.u32 %s39, 1
        %s756 = scalar_lea.sflag [#allocation5], %s755
        %s757 = sand.u32 %s366, 1
        %s758 = smul.addr %s757, 256
        %s759 = scalar_lea.vmem [#allocation13], %s758
        // Predicated region
        $region109: #{tpu_custom_call.1} parent=83 // pred_check
          %p760 = pneg %p379
        $region110: #{tpu_custom_call.1} parent=83 // pred_check_branch
          %762 = sbr.rel (%p760) target = $region112
        $region111: #{tpu_custom_call.1} parent=83 // pred_region
          %763 = dma.done %s756, 4096
        $region112: #{tpu_custom_call.1} parent=83 // pred_fallthru
          _
        %s764 = sand.u32 %s39, 1
        %s765 = scalar_lea.sflag [#allocation5], %s764
        %s766 = sand.u32 %s59, 1
        %s767 = smul.addr %s766, 8
        %s768 = scalar_lea.vmem [#allocation4], %s767
        %p769 = pneg %p72
        %p770 = pneg %p69
        %p771 = pneg %p93
        %p772 = pneg %p90
        %p773 = scmp.lt.s32.totalorder %s44, 2
        %s774 = scalar_select %p773, %s44, 2
        %s775 = scalar_lea.vmem %s2, %s774
        %p776 = pneg %p119
        %p777 = pneg %p116
        %s778 = sand.u32 %s39, 1
        %s779 = scalar_lea.sflag [#allocation5], %s778
        %s780 = sand.u32 %s132, 1
        %s781 = scalar_lea.vmem [#allocation9], %s780
        %p782 = pneg %p145
        %p783 = pneg %p142
        %s784 = sand.u32 %s39, 1
        %s785 = scalar_lea.sflag [#allocation5], %s784
        %s786 = sand.u32 %s158, 1
        %s787 = smul.addr %s786, 384
        %s788 = scalar_lea.vmem [#allocation10], %s787
        %p789 = pneg %p171
        %p790 = pneg %p168
        %p791 = scmp.lt.s32.totalorder %s44, 2
        %s792 = scalar_select %p791, %s44, 2
        %s793 = smul.addr %s792, 3
        %s794 = scalar_lea.vmem %s5, %s793
        %p795 = pneg %p197
        %p796 = pneg %p194
        %s797 = sand.u32 %s39, 1
        %s798 = scalar_lea.sflag [#allocation5], %s797
        %s799 = sand.u32 %s210, 1
        %s800 = smul.addr %s799, 128
        %s801 = scalar_lea.vmem [#allocation11], %s800
        %p802 = pneg %p223
        %p803 = pneg %p220
        %p804 = scmp.lt.s32.totalorder %s44, 2
        %s805 = scalar_select %p804, %s44, 2
        %s806 = scalar_lea.vmem %s7, %s805
        %p807 = pneg %p249
        %p808 = pneg %p246
        %p809 = scmp.lt.s32.totalorder %s44, 2
        %s810 = scalar_select %p809, %s44, 2
        %s811 = scalar_lea.vmem %s8, %s810
        %p812 = pneg %p275
        %p813 = pneg %p272
        %p814 = scmp.lt.s32.totalorder %s44, 2
        %s815 = scalar_select %p814, %s44, 2
        %s816 = scalar_lea.vmem %s9, %s815
        %p817 = pneg %p301
        %p818 = pneg %p298
        %s819 = sand.u32 %s39, 1
        %s820 = scalar_lea.sflag [#allocation5], %s819
        %s821 = sand.u32 %s314, 1
        %s822 = smul.addr %s821, 256
        %s823 = scalar_lea.vmem [#allocation12], %s822
        %p824 = pneg %p327
        %p825 = pneg %p324
        %p826 = scmp.lt.s32.totalorder %s44, 2
        %s827 = scalar_select %p826, %s44, 2
        %s828 = smul.addr %s827, 2
        %s829 = scalar_lea.vmem %s11, %s828
        %p830 = pneg %p353
        %p831 = pneg %p350
        %s832 = sand.u32 %s39, 1
        %s833 = scalar_lea.sflag [#allocation5], %s832
        %s834 = sand.u32 %s366, 1
        %s835 = smul.addr %s834, 256
        %s836 = scalar_lea.vmem [#allocation13], %s835
        %p837 = pneg %p379
        %p838 = pneg %p376
        %p839 = scmp.lt.s32.totalorder %s44, 2
        %s840 = scalar_select %p839, %s44, 2
        %s841 = scalar_lea.vmem %s13, %s840
        %p842 = pneg %p405
        %p843 = pneg %p402
        %p844 = pneg %p426
        %p845 = pneg %p423
        %p846 = pneg %p447
        %p847 = pneg %p444
        %p848 = pneg %p475
        %p849 = pneg %p472
        %s850 = sand.u32 %s462, 1
        %s851 = scalar_lea.sflag [#allocation6], %s850
        %s852 = sand.u32 %s462, 1
        %s853 = smul.addr %s852, 8
        %s854 = scalar_lea.vmem [#allocation14], %s853
        %p855 = pneg %p501
        %p856 = pneg %p498
        %s857 = sand.u32 %s488, 1
        %s858 = scalar_lea.sflag [#allocation16], %s857
        %s859 = sand.u32 %s488, 1
        %s860 = smul.addr %s859, 8
        %s861 = scalar_lea.vmem [#allocation15], %s860
        %p862 = scmp.lt.s32.totalorder %s44, 2
        %s863 = scalar_select %p862, %s44, 2
        %s864 = scalar_lea.vmem %s2, %s863
        %p865 = scmp.lt.s32.totalorder %s44, 2
        %s866 = scalar_select %p865, %s44, 2
        %s867 = smul.addr %s866, 3
        %s868 = scalar_lea.vmem %s5, %s867
        %p869 = scmp.lt.s32.totalorder %s44, 2
        %s870 = scalar_select %p869, %s44, 2
        %s871 = scalar_lea.vmem %s7, %s870
        %p872 = scmp.lt.s32.totalorder %s44, 2
        %s873 = scalar_select %p872, %s44, 2
        %s874 = scalar_lea.vmem %s8, %s873
        %p875 = scmp.lt.s32.totalorder %s44, 2
        %s876 = scalar_select %p875, %s44, 2
        %s877 = scalar_lea.vmem %s9, %s876
        %p878 = scmp.lt.s32.totalorder %s44, 2
        %s879 = scalar_select %p878, %s44, 2
        %s880 = smul.addr %s879, 2
        %s881 = scalar_lea.vmem %s11, %s880
        %p882 = scmp.lt.s32.totalorder %s44, 2
        %s883 = scalar_select %p882, %s44, 2
        %s884 = scalar_lea.vmem %s13, %s883
        %p885 = scmp.eq.s32.totalorder %s44, 0
        // Predicated region
        $region113: #{tpu_custom_call.1} parent=83 // pred_check
          %p886 = pneg %p885
        $region114: #{tpu_custom_call.1} parent=83 // pred_check_branch
          %888 = sbr.rel (%p886) target = $region116
        $region115: #{tpu_custom_call.1} parent=83 // pred_region
          %v889 = vld [vmem:[%s711] sm:$0xff]
          %v890 = vld [vmem:[#allocation7] sm:$0xff]
          %v891 = vadd.f32 %v889, %v890
          %892 = vst [vmem:[#allocation2] sm:$0xff] %v891
        $region116: #{tpu_custom_call.1} parent=83 // pred_fallthru
          _
        %v893 = vld [vmem:[#allocation2] sm:$0xff]
        %v894 = vld [vmem:[%s864] sm:$0x1]
        %v895 = vld [vmem:[%s723] sm:$0x1]
        %896 = vadd.xlane.f32.xlu0 %v893
        %v897 = vpop.xlane.xlu0 %896
        %v898 = vrcp.pop 128.0
        %v899 = vmul.f32 %v897, %v898
        %v900 = vsub.f32 %v893, %v899
        %v901 = vmul.f32 %v900, %v900
        %902 = vadd.xlane.f32.xlu0 %v901
        %v903 = vpop.xlane.xlu0 %902
        %v904 = vmul.f32 %v903, %v898
        %v905 = vadd.f32 %v904, 0.02
        %v906 = vrsqrt.pop %v905
        %v907 = vmul.f32 %v900, %v906
        %v909 = vlaneseq
        %v910 = vshrl.u32 %v909, 7
        %v911 = vsub.s32 0, %v910
        %v912 = vrot.slane %v894, %v911
        %v914 = vmul.f32 %v907, %v912
        %v916 = vlaneseq
        %v917 = vshrl.u32 %v916, 7
        %v918 = vsub.s32 0, %v917
        %v919 = vrot.slane %v895, %v918
        %v921 = vadd.f32 %v914, %v919
        %v922 = vld [vmem:[%s732] sm:$0xff]
        %v923 = vld [vmem:[%s732 + $0x8] sm:$0xff]
        %v924 = vld [vmem:[%s732 + $0x10] sm:$0xff]
        %v925 = vld [vmem:[%s732 + $0x18] sm:$0xff]
        %v926 = vld [vmem:[%s732 + $0x20] sm:$0xff]
        %v927 = vld [vmem:[%s732 + $0x28] sm:$0xff]
        %v928 = vld [vmem:[%s732 + $0x30] sm:$0xff]
        %v929 = vld [vmem:[%s732 + $0x38] sm:$0xff]
        %v930 = vld [vmem:[%s732 + $0x40] sm:$0xff]
        %v931 = vld [vmem:[%s732 + $0x48] sm:$0xff]
        %v932 = vld [vmem:[%s732 + $0x50] sm:$0xff]
        %v933 = vld [vmem:[%s732 + $0x58] sm:$0xff]
        %v934 = vld [vmem:[%s732 + $0x60] sm:$0xff]
        %v935 = vld [vmem:[%s732 + $0x68] sm:$0xff]
        %v936 = vld [vmem:[%s732 + $0x70] sm:$0xff]
        %v937 = vld [vmem:[%s732 + $0x78] sm:$0xff]
        %v938 = vld [vmem:[%s732 + $0x80] sm:$0xff]
        %v939 = vld [vmem:[%s732 + $0x88] sm:$0xff]
        %v940 = vld [vmem:[%s732 + $0x90] sm:$0xff]
        %v941 = vld [vmem:[%s732 + $0x98] sm:$0xff]
        %v942 = vld [vmem:[%s732 + $0xa0] sm:$0xff]
        %v943 = vld [vmem:[%s732 + $0xa8] sm:$0xff]
        %v944 = vld [vmem:[%s732 + $0xb0] sm:$0xff]
        %v945 = vld [vmem:[%s732 + $0xb8] sm:$0xff]
        %v946 = vld [vmem:[%s732 + $0xc0] sm:$0xff]
        %v947 = vld [vmem:[%s732 + $0xc8] sm:$0xff]
        %v948 = vld [vmem:[%s732 + $0xd0] sm:$0xff]
        %v949 = vld [vmem:[%s732 + $0xd8] sm:$0xff]
        %v950 = vld [vmem:[%s732 + $0xe0] sm:$0xff]
        %v951 = vld [vmem:[%s732 + $0xe8] sm:$0xff]
        %v952 = vld [vmem:[%s732 + $0xf0] sm:$0xff]
        %v953 = vld [vmem:[%s732 + $0xf8] sm:$0xff]
        %v954 = vld [vmem:[%s732 + $0x100] sm:$0xff]
        %v955 = vld [vmem:[%s732 + $0x108] sm:$0xff]
        %v956 = vld [vmem:[%s732 + $0x110] sm:$0xff]
        %v957 = vld [vmem:[%s732 + $0x118] sm:$0xff]
        %v958 = vld [vmem:[%s732 + $0x120] sm:$0xff]
        %v959 = vld [vmem:[%s732 + $0x128] sm:$0xff]
        %v960 = vld [vmem:[%s732 + $0x130] sm:$0xff]
        %v961 = vld [vmem:[%s732 + $0x138] sm:$0xff]
        %v962 = vld [vmem:[%s732 + $0x140] sm:$0xff]
        %v963 = vld [vmem:[%s732 + $0x148] sm:$0xff]
        %v964 = vld [vmem:[%s732 + $0x150] sm:$0xff]
        %v965 = vld [vmem:[%s732 + $0x158] sm:$0xff]
        %v966 = vld [vmem:[%s732 + $0x160] sm:$0xff]
        %v967 = vld [vmem:[%s732 + $0x168] sm:$0xff]
        %v968 = vld [vmem:[%s732 + $0x170] sm:$0xff]
        %v969 = vld [vmem:[%s732 + $0x178] sm:$0xff]
        %v970 = vld [vmem:[%s868] sm:$0x7]
        %v972 = vlaneseq
        %v973 = vshrl.u32 %v972, 7
        %v974 = vsub.s32 0, %v973
        %v975 = vrot.slane %v970, %v974
        %v976 = vlaneseq
        %v977 = vshrl.u32 %v976, 7
        %v978 = vsub.s32 1, %v977
        %v979 = vrot.slane %v970, %v978
        %v980 = vlaneseq
        %v981 = vshrl.u32 %v980, 7
        %v982 = vsub.s32 2, %v981
        %v983 = vrot.slane %v970, %v982
        %987 = vmatprep.subr.mxu0 %v923
        %988 = vmatpush1.msra.mxu0 %v922
        %989 = vmatprep.subr.mxu0 %v926
        %990 = vmatpush1.msra.mxu0 %v925
        %991 = vmatprep.subr.mxu0 %v929
        %992 = vmatpush1.msra.mxu0 %v928
        %993 = vmatprep.subr.mxu0 %v932
        %994 = vmatpush1.msra.mxu0 %v931
        %995 = vmatprep.subr.mxu0 %v935
        %996 = vmatpush1.msra.mxu0 %v934
        %997 = vmatprep.subr.mxu0 %v938
        %998 = vmatpush1.msra.mxu0 %v937
        %999 = vmatprep.subr.mxu0 %v941
        %1000 = vmatpush1.msra.mxu0 %v940
        %1001 = vmatprep.subr.mxu0 %v944
        %1002 = vmatpush1.msra.mxu0 %v943
        %1003 = vmatprep.subr.mxu0 %v947
        %1004 = vmatpush1.msra.mxu0 %v946
        %1005 = vmatprep.subr.mxu0 %v950
        %1006 = vmatpush1.msra.mxu0 %v949
        %1007 = vmatprep.subr.mxu0 %v953
        %1008 = vmatpush1.msra.mxu0 %v952
        %1009 = vmatprep.subr.mxu0 %v956
        %1010 = vmatpush1.msra.mxu0 %v955
        %1011 = vmatprep.subr.mxu0 %v959
        %1012 = vmatpush1.msra.mxu0 %v958
        %1013 = vmatprep.subr.mxu0 %v962
        %1014 = vmatpush1.msra.mxu0 %v961
        %1015 = vmatprep.subr.mxu0 %v965
        %1016 = vmatpush1.msra.mxu0 %v964
        %1017 = vmatprep.subr.mxu0 %v968
        %1018 = vmatpush1.msra.mxu0 %v967
        %1019 = vmatprep.subr.mxu0 0.0
        %1020 = vmatpush1.msra.mxu0 0.0
        %1021 = vmatprep.subr.mxu0 0.0
        %1022 = vmatpush1.msra.mxu0 0.0
        %1023 = vmatprep.subr.mxu0 0.0
        %1024 = vmatpush1.msra.mxu0 0.0
        %1025 = vmatprep.subr.mxu0 0.0
        %1026 = vmatpush1.msra.mxu0 0.0
        %1027 = vmatprep.subr.mxu0 0.0
        %1028 = vmatpush1.msra.mxu0 0.0
        %1029 = vmatprep.subr.mxu0 0.0
        %1030 = vmatpush1.msra.mxu0 0.0
        %1031 = vmatprep.subr.mxu0 0.0
        %1032 = vmatpush1.msra.mxu0 0.0
        %1033 = vmatprep.subr.mxu0 0.0
        %1034 = vmatpush1.msra.mxu0 0.0
        %1035 = vmatprep.subr.mxu0 0.0
        %1036 = vmatpush1.msra.mxu0 0.0
        %1037 = vmatprep.subr.mxu0 0.0
        %1038 = vmatpush1.msra.mxu0 0.0
        %1039 = vmatprep.subr.mxu0 0.0
        %1040 = vmatpush1.msra.mxu0 0.0
        %1041 = vmatprep.subr.mxu0 0.0
        %1042 = vmatpush1.msra.mxu0 0.0
        %1043 = vmatprep.subr.mxu0 0.0
        %1044 = vmatpush1.msra.mxu0 0.0
        %1045 = vmatprep.subr.mxu0 0.0
        %1046 = vmatpush1.msra.mxu0 0.0
        %1047 = vmatprep.subr.mxu0 0.0
        %1048 = vmatpush1.msra.mxu0 0.0
        %1049 = vmatprep.subr.mxu0 0.0
        %1050 = vmatpush1.msra.mxu0 0.0
        %1051 = vmatprep.mubr.f32.mxu0 0.0
        %1052 = vmatmul.mubr.f32.gmra.mrb[0].mxu0 %v921
        %v1053 = vpop.f32.mrb[0].mxu0
        %v1054 = vadd.f32 %v975, %v1053
        %v1055 = vpop.f32.mrb[0].mxu0
        %v1056 = vadd.f32 %v979, %v1055
        %1057 = vdwg.mxu0
        %1058 = vmatprep.subr.mxu0 0.0
        %1059 = vmatpush1.msra.mxu0 %v924
        %1060 = vmatprep.subr.mxu0 0.0
        %1061 = vmatpush1.msra.mxu0 %v927
        %1062 = vmatprep.subr.mxu0 0.0
        %1063 = vmatpush1.msra.mxu0 %v930
        %1064 = vmatprep.subr.mxu0 0.0
        %1065 = vmatpush1.msra.mxu0 %v933
        %1066 = vmatprep.subr.mxu0 0.0
        %1067 = vmatpush1.msra.mxu0 %v936
        %1068 = vmatprep.subr.mxu0 0.0
        %1069 = vmatpush1.msra.mxu0 %v939
        %1070 = vmatprep.subr.mxu0 0.0
        %1071 = vmatpush1.msra.mxu0 %v942
        %1072 = vmatprep.subr.mxu0 0.0
        %1073 = vmatpush1.msra.mxu0 %v945
        %1074 = vmatprep.subr.mxu0 0.0
        %1075 = vmatpush1.msra.mxu0 %v948
        %1076 = vmatprep.subr.mxu0 0.0
        %1077 = vmatpush1.msra.mxu0 %v951
        %1078 = vmatprep.subr.mxu0 0.0
        %1079 = vmatpush1.msra.mxu0 %v954
        %1080 = vmatprep.subr.mxu0 0.0
        %1081 = vmatpush1.msra.mxu0 %v957
        %1082 = vmatprep.subr.mxu0 0.0
        %1083 = vmatpush1.msra.mxu0 %v960
        %1084 = vmatprep.subr.mxu0 0.0
        %1085 = vmatpush1.msra.mxu0 %v963
        %1086 = vmatprep.subr.mxu0 0.0
        %1087 = vmatpush1.msra.mxu0 %v966
        %1088 = vmatprep.subr.mxu0 0.0
        %1089 = vmatpush1.msra.mxu0 %v969
        %1090 = vmatprep.subr.mxu0 0.0
        %1091 = vmatpush1.msra.mxu0 0.0
        %1092 = vmatprep.subr.mxu0 0.0
        %1093 = vmatpush1.msra.mxu0 0.0
        %1094 = vmatprep.subr.mxu0 0.0
        %1095 = vmatpush1.msra.mxu0 0.0
        %1096 = vmatprep.subr.mxu0 0.0
        %1097 = vmatpush1.msra.mxu0 0.0
        %1098 = vmatprep.subr.mxu0 0.0
        %1099 = vmatpush1.msra.mxu0 0.0
        %1100 = vmatprep.subr.mxu0 0.0
        %1101 = vmatpush1.msra.mxu0 0.0
        %1102 = vmatprep.subr.mxu0 0.0
        %1103 = vmatpush1.msra.mxu0 0.0
        %1104 = vmatprep.subr.mxu0 0.0
        %1105 = vmatpush1.msra.mxu0 0.0
        %1106 = vmatprep.subr.mxu0 0.0
        %1107 = vmatpush1.msra.mxu0 0.0
        %1108 = vmatprep.subr.mxu0 0.0
        %1109 = vmatpush1.msra.mxu0 0.0
        %1110 = vmatprep.subr.mxu0 0.0
        %1111 = vmatpush1.msra.mxu0 0.0
        %1112 = vmatprep.subr.mxu0 0.0
        %1113 = vmatpush1.msra.mxu0 0.0
        %1114 = vmatprep.subr.mxu0 0.0
        %1115 = vmatpush1.msra.mxu0 0.0
        %1116 = vmatprep.subr.mxu0 0.0
        %1117 = vmatpush1.msra.mxu0 0.0
        %1118 = vmatprep.subr.mxu0 0.0
        %1119 = vmatpush1.msra.mxu0 0.0
        %1120 = vmatprep.subr.mxu0 0.0
        %1121 = vmatpush1.msra.mxu0 0.0
        %1122 = vmatprep.mubr.f32.mxu0 0.0
        %1123 = vmatmul.mubr.f32.gmra.mrb[0].mxu0 %v921
        %v1124 = vpop.f32.mrb[0].mxu0
        %v1125 = vadd.f32 %v983, %v1124
        %v1126 = vpop.f32.mrb[0].mxu0
        %1127 = vdwg.mxu0
        %vm1128 = vcmask 261120
        %v1130 = vsel %vm1128, %v1054, 0
        %v1133 = vsel %vm1128, %v1056, 0
        %1135 = vmatprep.subr.mxu0 0.0
        %1136 = vmatpush1.xpose.msra.mxu0 %v1133
        %1137 = vmatprep.subr.mxu0 0.0
        %1138 = vmatpush1.xpose.msra.mxu0 0.0
        %1139 = vmatprep.subr.mxu0 0.0
        %1140 = vmatpush1.xpose.msra.mxu0 0.0
        %1141 = vmatprep.subr.mxu0 0.0
        %1142 = vmatpush1.xpose.msra.mxu0 0.0
        %1143 = vmatprep.subr.mxu0 0.0
        %1144 = vmatpush1.xpose.msra.mxu0 0.0
        %1145 = vmatprep.subr.mxu0 0.0
        %1146 = vmatpush1.xpose.msra.mxu0 0.0
        %1147 = vmatprep.subr.mxu0 0.0
        %1148 = vmatpush1.xpose.msra.mxu0 0.0
        %1149 = vmatprep.subr.mxu0 0.0
        %1150 = vmatpush1.xpose.msra.mxu0 0.0
        %1151 = vmatprep.subr.mxu0 0.0
        %1152 = vmatpush1.xpose.msra.mxu0 0.0
        %1153 = vmatprep.subr.mxu0 0.0
        %1154 = vmatpush1.xpose.msra.mxu0 0.0
        %1155 = vmatprep.subr.mxu0 0.0
        %1156 = vmatpush1.xpose.msra.mxu0 0.0
        %1157 = vmatprep.subr.mxu0 0.0
        %1158 = vmatpush1.xpose.msra.mxu0 0.0
        %1159 = vmatprep.subr.mxu0 0.0
        %1160 = vmatpush1.xpose.msra.mxu0 0.0
        %1161 = vmatprep.subr.mxu0 0.0
        %1162 = vmatpush1.xpose.msra.mxu0 0.0
        %1163 = vmatprep.subr.mxu0 0.0
        %1164 = vmatpush1.xpose.msra.mxu0 0.0
        %1165 = vmatprep.subr.mxu0 0.0
        %1166 = vmatpush1.xpose.msra.mxu0 0.0
        %1167 = vmatprep.subr.mxu0 0.0
        %1168 = vmatpush1.xpose.msra.mxu0 0.0
        %1169 = vmatprep.subr.mxu0 0.0
        %1170 = vmatpush1.xpose.msra.mxu0 0.0
        %1171 = vmatprep.subr.mxu0 0.0
        %1172 = vmatpush1.xpose.msra.mxu0 0.0
        %1173 = vmatprep.subr.mxu0 0.0
        %1174 = vmatpush1.xpose.msra.mxu0 0.0
        %1175 = vmatprep.subr.mxu0 0.0
        %1176 = vmatpush1.xpose.msra.mxu0 0.0
        %1177 = vmatprep.subr.mxu0 0.0
        %1178 = vmatpush1.xpose.msra.mxu0 0.0
        %1179 = vmatprep.subr.mxu0 0.0
        %1180 = vmatpush1.xpose.msra.mxu0 0.0
        %1181 = vmatprep.subr.mxu0 0.0
        %1182 = vmatpush1.xpose.msra.mxu0 0.0
        %1183 = vmatprep.subr.mxu0 0.0
        %1184 = vmatpush1.xpose.msra.mxu0 0.0
        %1185 = vmatprep.subr.mxu0 0.0
        %1186 = vmatpush1.xpose.msra.mxu0 0.0
        %1187 = vmatprep.subr.mxu0 0.0
        %1188 = vmatpush1.xpose.msra.mxu0 0.0
        %1189 = vmatprep.subr.mxu0 0.0
        %1190 = vmatpush1.xpose.msra.mxu0 0.0
        %1191 = vmatprep.subr.mxu0 0.0
        %1192 = vmatpush1.xpose.msra.mxu0 0.0
        %1193 = vmatprep.subr.mxu0 0.0
        %1194 = vmatpush1.xpose.msra.mxu0 0.0
        %1195 = vmatprep.subr.mxu0 0.0
        %1196 = vmatpush1.xpose.msra.mxu0 0.0
        %1197 = vmatprep.subr.mxu0 0.0
        %1198 = vmatpush1.xpose.msra.mxu0 0.0
        %1199 = vmatprep.mubr.f32.mxu0 0.0
        %1200 = vmatmul.mubr.f32.gmra.mrb[0].mxu0 %v1130
        %v1201 = vpop.f32.mrb[0].mxu0
        %v1202 = vadd.f32 0.0, %v1201
        %v1203 = vpop.f32.mrb[0].mxu0
        %1204 = vdwg.mxu0
        %vm1205 = vcmask 64512
        %v1206 = vsel %vm1205, %v1202, -inf
        %1207 = vmax.xlane.f32.xlu0 %v1206
        %v1208 = vpop.xlane.xlu0 %1207
        %v1209 = vsub.f32 %v1202, %v1208
        %v1210 = vmul.f32 %v1209, 1.442695
        %v1211 = vpow.pop %v1210
        %v1212 = vsel %vm1205, %v1211, 0.0
        %1213 = vadd.xlane.f32.xlu0 %v1212
        %v1214 = vpop.xlane.xlu0 %1213
        %v1215 = vrcp.pop %v1214
        %v1216 = vmul.f32 %v1211, %v1215
        %v1218 = vsel %vm1205, %v1216, 0
        %1220 = vmatprep.subr.mxu0 0.0
        %1221 = vmatpush1.msra.mxu0 %v1125
        %1222 = vmatprep.subr.mxu0 0.0
        %1223 = vmatpush1.msra.mxu0 0.0
        %1224 = vmatprep.subr.mxu0 0.0
        %1225 = vmatpush1.msra.mxu0 0.0
        %1226 = vmatprep.subr.mxu0 0.0
        %1227 = vmatpush1.msra.mxu0 0.0
        %1228 = vmatprep.subr.mxu0 0.0
        %1229 = vmatpush1.msra.mxu0 0.0
        %1230 = vmatprep.subr.mxu0 0.0
        %1231 = vmatpush1.msra.mxu0 0.0
        %1232 = vmatprep.subr.mxu0 0.0
        %1233 = vmatpush1.msra.mxu0 0.0
        %1234 = vmatprep.subr.mxu0 0.0
        %1235 = vmatpush1.msra.mxu0 0.0
        %1236 = vmatprep.subr.mxu0 0.0
        %1237 = vmatpush1.msra.mxu0 0.0
        %1238 = vmatprep.subr.mxu0 0.0
        %1239 = vmatpush1.msra.mxu0 0.0
        %1240 = vmatprep.subr.mxu0 0.0
        %1241 = vmatpush1.msra.mxu0 0.0
        %1242 = vmatprep.subr.mxu0 0.0
        %1243 = vmatpush1.msra.mxu0 0.0
        %1244 = vmatprep.subr.mxu0 0.0
        %1245 = vmatpush1.msra.mxu0 0.0
        %1246 = vmatprep.subr.mxu0 0.0
        %1247 = vmatpush1.msra.mxu0 0.0
        %1248 = vmatprep.subr.mxu0 0.0
        %1249 = vmatpush1.msra.mxu0 0.0
        %1250 = vmatprep.subr.mxu0 0.0
        %1251 = vmatpush1.msra.mxu0 0.0
        %1252 = vmatprep.subr.mxu0 0.0
        %1253 = vmatpush1.msra.mxu0 0.0
        %1254 = vmatprep.subr.mxu0 0.0
        %1255 = vmatpush1.msra.mxu0 0.0
        %1256 = vmatprep.subr.mxu0 0.0
        %1257 = vmatpush1.msra.mxu0 0.0
        %1258 = vmatprep.subr.mxu0 0.0
        %1259 = vmatpush1.msra.mxu0 0.0
        %1260 = vmatprep.subr.mxu0 0.0
        %1261 = vmatpush1.msra.mxu0 0.0
        %1262 = vmatprep.subr.mxu0 0.0
        %1263 = vmatpush1.msra.mxu0 0.0
        %1264 = vmatprep.subr.mxu0 0.0
        %1265 = vmatpush1.msra.mxu0 0.0
        %1266 = vmatprep.subr.mxu0 0.0
        %1267 = vmatpush1.msra.mxu0 0.0
        %1268 = vmatprep.subr.mxu0 0.0
        %1269 = vmatpush1.msra.mxu0 0.0
        %1270 = vmatprep.subr.mxu0 0.0
        %1271 = vmatpush1.msra.mxu0 0.0
        %1272 = vmatprep.subr.mxu0 0.0
        %1273 = vmatpush1.msra.mxu0 0.0
        %1274 = vmatprep.subr.mxu0 0.0
        %1275 = vmatpush1.msra.mxu0 0.0
        %1276 = vmatprep.subr.mxu0 0.0
        %1277 = vmatpush1.msra.mxu0 0.0
        %1278 = vmatprep.subr.mxu0 0.0
        %1279 = vmatpush1.msra.mxu0 0.0
        %1280 = vmatprep.subr.mxu0 0.0
        %1281 = vmatpush1.msra.mxu0 0.0
        %1282 = vmatprep.subr.mxu0 0.0
        %1283 = vmatpush1.msra.mxu0 0.0
        %1284 = vmatprep.mubr.f32.mxu0 0.0
        %1285 = vmatmul.mubr.f32.gmra.mrb[0].mxu0 %v1218
        %v1286 = vpop.f32.mrb[0].mxu0
        %v1287 = vadd.f32 0.0, %v1286
        %v1288 = vpop.f32.mrb[0].mxu0
        %1289 = vdwg.mxu0
        %1290 = vst.msk [vmem:[#allocation3] sm:$0xff] %vm1128, %v1287
        %1291 = vrot.lane.b32.xlu0 %v1054, 96
        %v1292 = vpop.permute.xlu0 %1291
        %1293 = vrot.lane.b32.xlu0 %v1056, 96
        %v1294 = vpop.permute.xlu0 %1293
        %v1295 = vsel %vm1128, %v1292, 0
        %v1297 = vsel %vm1128, %v1294, 0
        %1299 = vmatprep.subr.mxu0 0.0
        %1300 = vmatpush1.xpose.msra.mxu0 %v1297
        %1301 = vmatprep.subr.mxu0 0.0
        %1302 = vmatpush1.xpose.msra.mxu0 0.0
        %1303 = vmatprep.subr.mxu0 0.0
        %1304 = vmatpush1.xpose.msra.mxu0 0.0
        %1305 = vmatprep.subr.mxu0 0.0
        %1306 = vmatpush1.xpose.msra.mxu0 0.0
        %1307 = vmatprep.subr.mxu0 0.0
        %1308 = vmatpush1.xpose.msra.mxu0 0.0
        %1309 = vmatprep.subr.mxu0 0.0
        %1310 = vmatpush1.xpose.msra.mxu0 0.0
        %1311 = vmatprep.subr.mxu0 0.0
        %1312 = vmatpush1.xpose.msra.mxu0 0.0
        %1313 = vmatprep.subr.mxu0 0.0
        %1314 = vmatpush1.xpose.msra.mxu0 0.0
        %1315 = vmatprep.subr.mxu0 0.0
        %1316 = vmatpush1.xpose.msra.mxu0 0.0
        %1317 = vmatprep.subr.mxu0 0.0
        %1318 = vmatpush1.xpose.msra.mxu0 0.0
        %1319 = vmatprep.subr.mxu0 0.0
        %1320 = vmatpush1.xpose.msra.mxu0 0.0
        %1321 = vmatprep.subr.mxu0 0.0
        %1322 = vmatpush1.xpose.msra.mxu0 0.0
        %1323 = vmatprep.subr.mxu0 0.0
        %1324 = vmatpush1.xpose.msra.mxu0 0.0
        %1325 = vmatprep.subr.mxu0 0.0
        %1326 = vmatpush1.xpose.msra.mxu0 0.0
        %1327 = vmatprep.subr.mxu0 0.0
        %1328 = vmatpush1.xpose.msra.mxu0 0.0
        %1329 = vmatprep.subr.mxu0 0.0
        %1330 = vmatpush1.xpose.msra.mxu0 0.0
        %1331 = vmatprep.subr.mxu0 0.0
        %1332 = vmatpush1.xpose.msra.mxu0 0.0
        %1333 = vmatprep.subr.mxu0 0.0
        %1334 = vmatpush1.xpose.msra.mxu0 0.0
        %1335 = vmatprep.subr.mxu0 0.0
        %1336 = vmatpush1.xpose.msra.mxu0 0.0
        %1337 = vmatprep.subr.mxu0 0.0
        %1338 = vmatpush1.xpose.msra.mxu0 0.0
        %1339 = vmatprep.subr.mxu0 0.0
        %1340 = vmatpush1.xpose.msra.mxu0 0.0
        %1341 = vmatprep.subr.mxu0 0.0
        %1342 = vmatpush1.xpose.msra.mxu0 0.0
        %1343 = vmatprep.subr.mxu0 0.0
        %1344 = vmatpush1.xpose.msra.mxu0 0.0
        %1345 = vmatprep.subr.mxu0 0.0
        %1346 = vmatpush1.xpose.msra.mxu0 0.0
        %1347 = vmatprep.subr.mxu0 0.0
        %1348 = vmatpush1.xpose.msra.mxu0 0.0
        %1349 = vmatprep.subr.mxu0 0.0
        %1350 = vmatpush1.xpose.msra.mxu0 0.0
        %1351 = vmatprep.subr.mxu0 0.0
        %1352 = vmatpush1.xpose.msra.mxu0 0.0
        %1353 = vmatprep.subr.mxu0 0.0
        %1354 = vmatpush1.xpose.msra.mxu0 0.0
        %1355 = vmatprep.subr.mxu0 0.0
        %1356 = vmatpush1.xpose.msra.mxu0 0.0
        %1357 = vmatprep.subr.mxu0 0.0
        %1358 = vmatpush1.xpose.msra.mxu0 0.0
        %1359 = vmatprep.subr.mxu0 0.0
        %1360 = vmatpush1.xpose.msra.mxu0 0.0
        %1361 = vmatprep.subr.mxu0 0.0
        %1362 = vmatpush1.xpose.msra.mxu0 0.0
        %1363 = vmatprep.mubr.f32.mxu0 0.0
        %1364 = vmatmul.mubr.f32.gmra.mrb[0].mxu0 %v1295
        %v1365 = vpop.f32.mrb[0].mxu0
        %v1366 = vadd.f32 0.0, %v1365
        %v1367 = vpop.f32.mrb[0].mxu0
        %1368 = vdwg.mxu0
        %v1369 = vsel %vm1205, %v1366, -inf
        %1370 = vmax.xlane.f32.xlu0 %v1369
        %v1371 = vpop.xlane.xlu0 %1370
        %v1372 = vsub.f32 %v1366, %v1371
        %v1373 = vmul.f32 %v1372, 1.442695
        %v1374 = vpow.pop %v1373
        %v1375 = vsel %vm1205, %v1374, 0.0
        %1376 = vadd.xlane.f32.xlu0 %v1375
        %v1377 = vpop.xlane.xlu0 %1376
        %v1378 = vrcp.pop %v1377
        %v1379 = vmul.f32 %v1374, %v1378
        %1381 = vrot.lane.b32.xlu0 %v1125, 96
        %v1382 = vpop.permute.xlu0 %1381
        %v1385 = vsel %vm1205, %v1379, 0
        %1387 = vmatprep.subr.mxu0 0.0
        %1388 = vmatpush1.msra.mxu0 %v1382
        %1389 = vmatprep.subr.mxu0 0.0
        %1390 = vmatpush1.msra.mxu0 0.0
        %1391 = vmatprep.subr.mxu0 0.0
        %1392 = vmatpush1.msra.mxu0 0.0
        %1393 = vmatprep.subr.mxu0 0.0
        %1394 = vmatpush1.msra.mxu0 0.0
        %1395 = vmatprep.subr.mxu0 0.0
        %1396 = vmatpush1.msra.mxu0 0.0
        %1397 = vmatprep.subr.mxu0 0.0
        %1398 = vmatpush1.msra.mxu0 0.0
        %1399 = vmatprep.subr.mxu0 0.0
        %1400 = vmatpush1.msra.mxu0 0.0
        %1401 = vmatprep.subr.mxu0 0.0
        %1402 = vmatpush1.msra.mxu0 0.0
        %1403 = vmatprep.subr.mxu0 0.0
        %1404 = vmatpush1.msra.mxu0 0.0
        %1405 = vmatprep.subr.mxu0 0.0
        %1406 = vmatpush1.msra.mxu0 0.0
        %1407 = vmatprep.subr.mxu0 0.0
        %1408 = vmatpush1.msra.mxu0 0.0
        %1409 = vmatprep.subr.mxu0 0.0
        %1410 = vmatpush1.msra.mxu0 0.0
        %1411 = vmatprep.subr.mxu0 0.0
        %1412 = vmatpush1.msra.mxu0 0.0
        %1413 = vmatprep.subr.mxu0 0.0
        %1414 = vmatpush1.msra.mxu0 0.0
        %1415 = vmatprep.subr.mxu0 0.0
        %1416 = vmatpush1.msra.mxu0 0.0
        %1417 = vmatprep.subr.mxu0 0.0
        %1418 = vmatpush1.msra.mxu0 0.0
        %1419 = vmatprep.subr.mxu0 0.0
        %1420 = vmatpush1.msra.mxu0 0.0
        %1421 = vmatprep.subr.mxu0 0.0
        %1422 = vmatpush1.msra.mxu0 0.0
        %1423 = vmatprep.subr.mxu0 0.0
        %1424 = vmatpush1.msra.mxu0 0.0
        %1425 = vmatprep.subr.mxu0 0.0
        %1426 = vmatpush1.msra.mxu0 0.0
        %1427 = vmatprep.subr.mxu0 0.0
        %1428 = vmatpush1.msra.mxu0 0.0
        %1429 = vmatprep.subr.mxu0 0.0
        %1430 = vmatpush1.msra.mxu0 0.0
        %1431 = vmatprep.subr.mxu0 0.0
        %1432 = vmatpush1.msra.mxu0 0.0
        %1433 = vmatprep.subr.mxu0 0.0
        %1434 = vmatpush1.msra.mxu0 0.0
        %1435 = vmatprep.subr.mxu0 0.0
        %1436 = vmatpush1.msra.mxu0 0.0
        %1437 = vmatprep.subr.mxu0 0.0
        %1438 = vmatpush1.msra.mxu0 0.0
        %1439 = vmatprep.subr.mxu0 0.0
        %1440 = vmatpush1.msra.mxu0 0.0
        %1441 = vmatprep.subr.mxu0 0.0
        %1442 = vmatpush1.msra.mxu0 0.0
        %1443 = vmatprep.subr.mxu0 0.0
        %1444 = vmatpush1.msra.mxu0 0.0
        %1445 = vmatprep.subr.mxu0 0.0
        %1446 = vmatpush1.msra.mxu0 0.0
        %1447 = vmatprep.subr.mxu0 0.0
        %1448 = vmatpush1.msra.mxu0 0.0
        %1449 = vmatprep.subr.mxu0 0.0
        %1450 = vmatpush1.msra.mxu0 0.0
        %1451 = vmatprep.mubr.f32.mxu0 0.0
        %1452 = vmatmul.mubr.f32.gmra.mrb[0].mxu0 %v1385
        %v1453 = vpop.f32.mrb[0].mxu0
        %v1454 = vadd.f32 0.0, %v1453
        %v1455 = vpop.f32.mrb[0].mxu0
        %1456 = vdwg.mxu0
        %1458 = vrot.lane.b32.xlu0 %v1454, 32
        %v1459 = vpop.permute.xlu0 %1458
        %vm1461 = vcmask 523520
        %1462 = vst.msk [vmem:[#allocation3] sm:$0xff] %vm1461, %v1459
        %1463 = vrot.lane.b32.xlu0 %v1054, 64
        %v1464 = vpop.permute.xlu0 %1463
        %1465 = vrot.lane.b32.xlu0 %v1056, 64
        %v1466 = vpop.permute.xlu0 %1465
        %v1467 = vsel %vm1128, %v1464, 0
        %v1469 = vsel %vm1128, %v1466, 0
        %1471 = vmatprep.subr.mxu0 0.0
        %1472 = vmatpush1.xpose.msra.mxu0 %v1469
        %1473 = vmatprep.subr.mxu0 0.0
        %1474 = vmatpush1.xpose.msra.mxu0 0.0
        %1475 = vmatprep.subr.mxu0 0.0
        %1476 = vmatpush1.xpose.msra.mxu0 0.0
        %1477 = vmatprep.subr.mxu0 0.0
        %1478 = vmatpush1.xpose.msra.mxu0 0.0
        %1479 = vmatprep.subr.mxu0 0.0
        %1480 = vmatpush1.xpose.msra.mxu0 0.0
        %1481 = vmatprep.subr.mxu0 0.0
        %1482 = vmatpush1.xpose.msra.mxu0 0.0
        %1483 = vmatprep.subr.mxu0 0.0
        %1484 = vmatpush1.xpose.msra.mxu0 0.0
        %1485 = vmatprep.subr.mxu0 0.0
        %1486 = vmatpush1.xpose.msra.mxu0 0.0
        %1487 = vmatprep.subr.mxu0 0.0
        %1488 = vmatpush1.xpose.msra.mxu0 0.0
        %1489 = vmatprep.subr.mxu0 0.0
        %1490 = vmatpush1.xpose.msra.mxu0 0.0
        %1491 = vmatprep.subr.mxu0 0.0
        %1492 = vmatpush1.xpose.msra.mxu0 0.0
        %1493 = vmatprep.subr.mxu0 0.0
        %1494 = vmatpush1.xpose.msra.mxu0 0.0
        %1495 = vmatprep.subr.mxu0 0.0
        %1496 = vmatpush1.xpose.msra.mxu0 0.0
        %1497 = vmatprep.subr.mxu0 0.0
        %1498 = vmatpush1.xpose.msra.mxu0 0.0
        %1499 = vmatprep.subr.mxu0 0.0
        %1500 = vmatpush1.xpose.msra.mxu0 0.0
        %1501 = vmatprep.subr.mxu0 0.0
        %1502 = vmatpush1.xpose.msra.mxu0 0.0
        %1503 = vmatprep.subr.mxu0 0.0
        %1504 = vmatpush1.xpose.msra.mxu0 0.0
        %1505 = vmatprep.subr.mxu0 0.0
        %1506 = vmatpush1.xpose.msra.mxu0 0.0
        %1507 = vmatprep.subr.mxu0 0.0
        %1508 = vmatpush1.xpose.msra.mxu0 0.0
        %1509 = vmatprep.subr.mxu0 0.0
        %1510 = vmatpush1.xpose.msra.mxu0 0.0
        %1511 = vmatprep.subr.mxu0 0.0
        %1512 = vmatpush1.xpose.msra.mxu0 0.0
        %1513 = vmatprep.subr.mxu0 0.0
        %1514 = vmatpush1.xpose.msra.mxu0 0.0
        %1515 = vmatprep.subr.mxu0 0.0
        %1516 = vmatpush1.xpose.msra.mxu0 0.0
        %1517 = vmatprep.subr.mxu0 0.0
        %1518 = vmatpush1.xpose.msra.mxu0 0.0
        %1519 = vmatprep.subr.mxu0 0.0
        %1520 = vmatpush1.xpose.msra.mxu0 0.0
        %1521 = vmatprep.subr.mxu0 0.0
        %1522 = vmatpush1.xpose.msra.mxu0 0.0
        %1523 = vmatprep.subr.mxu0 0.0
        %1524 = vmatpush1.xpose.msra.mxu0 0.0
        %1525 = vmatprep.subr.mxu0 0.0
        %1526 = vmatpush1.xpose.msra.mxu0 0.0
        %1527 = vmatprep.subr.mxu0 0.0
        %1528 = vmatpush1.xpose.msra.mxu0 0.0
        %1529 = vmatprep.subr.mxu0 0.0
        %1530 = vmatpush1.xpose.msra.mxu0 0.0
        %1531 = vmatprep.subr.mxu0 0.0
        %1532 = vmatpush1.xpose.msra.mxu0 0.0
        %1533 = vmatprep.subr.mxu0 0.0
        %1534 = vmatpush1.xpose.msra.mxu0 0.0
        %1535 = vmatprep.mubr.f32.mxu0 0.0
        %1536 = vmatmul.mubr.f32.gmra.mrb[0].mxu0 %v1467
        %v1537 = vpop.f32.mrb[0].mxu0
        %v1538 = vadd.f32 0.0, %v1537
        %v1539 = vpop.f32.mrb[0].mxu0
        %1540 = vdwg.mxu0
        %v1541 = vsel %vm1205, %v1538, -inf
        %1542 = vmax.xlane.f32.xlu0 %v1541
        %v1543 = vpop.xlane.xlu0 %1542
        %v1544 = vsub.f32 %v1538, %v1543
        %v1545 = vmul.f32 %v1544, 1.442695
        %v1546 = vpow.pop %v1545
        %v1547 = vsel %vm1205, %v1546, 0.0
        %1548 = vadd.xlane.f32.xlu0 %v1547
        %v1549 = vpop.xlane.xlu0 %1548
        %v1550 = vrcp.pop %v1549
        %v1551 = vmul.f32 %v1546, %v1550
        %1552 = vrot.lane.b32.xlu0 %v1125, 64
        %v1553 = vpop.permute.xlu0 %1552
        %v1556 = vsel %vm1205, %v1551, 0
        %1558 = vmatprep.subr.mxu0 0.0
        %1559 = vmatpush1.msra.mxu0 %v1553
        %1560 = vmatprep.subr.mxu0 0.0
        %1561 = vmatpush1.msra.mxu0 0.0
        %1562 = vmatprep.subr.mxu0 0.0
        %1563 = vmatpush1.msra.mxu0 0.0
        %1564 = vmatprep.subr.mxu0 0.0
        %1565 = vmatpush1.msra.mxu0 0.0
        %1566 = vmatprep.subr.mxu0 0.0
        %1567 = vmatpush1.msra.mxu0 0.0
        %1568 = vmatprep.subr.mxu0 0.0
        %1569 = vmatpush1.msra.mxu0 0.0
        %1570 = vmatprep.subr.mxu0 0.0
        %1571 = vmatpush1.msra.mxu0 0.0
        %1572 = vmatprep.subr.mxu0 0.0
        %1573 = vmatpush1.msra.mxu0 0.0
        %1574 = vmatprep.subr.mxu0 0.0
        %1575 = vmatpush1.msra.mxu0 0.0
        %1576 = vmatprep.subr.mxu0 0.0
        %1577 = vmatpush1.msra.mxu0 0.0
        %1578 = vmatprep.subr.mxu0 0.0
        %1579 = vmatpush1.msra.mxu0 0.0
        %1580 = vmatprep.subr.mxu0 0.0
        %1581 = vmatpush1.msra.mxu0 0.0
        %1582 = vmatprep.subr.mxu0 0.0
        %1583 = vmatpush1.msra.mxu0 0.0
        %1584 = vmatprep.subr.mxu0 0.0
        %1585 = vmatpush1.msra.mxu0 0.0
        %1586 = vmatprep.subr.mxu0 0.0
        %1587 = vmatpush1.msra.mxu0 0.0
        %1588 = vmatprep.subr.mxu0 0.0
        %1589 = vmatpush1.msra.mxu0 0.0
        %1590 = vmatprep.subr.mxu0 0.0
        %1591 = vmatpush1.msra.mxu0 0.0
        %1592 = vmatprep.subr.mxu0 0.0
        %1593 = vmatpush1.msra.mxu0 0.0
        %1594 = vmatprep.subr.mxu0 0.0
        %1595 = vmatpush1.msra.mxu0 0.0
        %1596 = vmatprep.subr.mxu0 0.0
        %1597 = vmatpush1.msra.mxu0 0.0
        %1598 = vmatprep.subr.mxu0 0.0
        %1599 = vmatpush1.msra.mxu0 0.0
        %1600 = vmatprep.subr.mxu0 0.0
        %1601 = vmatpush1.msra.mxu0 0.0
        %1602 = vmatprep.subr.mxu0 0.0
        %1603 = vmatpush1.msra.mxu0 0.0
        %1604 = vmatprep.subr.mxu0 0.0
        %1605 = vmatpush1.msra.mxu0 0.0
        %1606 = vmatprep.subr.mxu0 0.0
        %1607 = vmatpush1.msra.mxu0 0.0
        %1608 = vmatprep.subr.mxu0 0.0
        %1609 = vmatpush1.msra.mxu0 0.0
        %1610 = vmatprep.subr.mxu0 0.0
        %1611 = vmatpush1.msra.mxu0 0.0
        %1612 = vmatprep.subr.mxu0 0.0
        %1613 = vmatpush1.msra.mxu0 0.0
        %1614 = vmatprep.subr.mxu0 0.0
        %1615 = vmatpush1.msra.mxu0 0.0
        %1616 = vmatprep.subr.mxu0 0.0
        %1617 = vmatpush1.msra.mxu0 0.0
        %1618 = vmatprep.subr.mxu0 0.0
        %1619 = vmatpush1.msra.mxu0 0.0
        %1620 = vmatprep.subr.mxu0 0.0
        %1621 = vmatpush1.msra.mxu0 0.0
        %1622 = vmatprep.mubr.f32.mxu0 0.0
        %1623 = vmatmul.mubr.f32.gmra.mrb[0].mxu0 %v1556
        %v1624 = vpop.f32.mrb[0].mxu0
        %v1625 = vadd.f32 0.0, %v1624
        %v1626 = vpop.f32.mrb[0].mxu0
        %1627 = vdwg.mxu0
        %1629 = vrot.lane.b32.xlu0 %v1625, 64
        %v1630 = vpop.permute.xlu0 %1629
        %vm1632 = vcmask 785920
        %1633 = vst.msk [vmem:[#allocation3] sm:$0xff] %vm1632, %v1630
        %1634 = vrot.lane.b32.xlu0 %v1054, 32
        %v1635 = vpop.permute.xlu0 %1634
        %1636 = vrot.lane.b32.xlu0 %v1056, 32
        %v1637 = vpop.permute.xlu0 %1636
        %v1638 = vsel %vm1128, %v1635, 0
        %v1640 = vsel %vm1128, %v1637, 0
        %1642 = vmatprep.subr.mxu0 0.0
        %1643 = vmatpush1.xpose.msra.mxu0 %v1640
        %1644 = vmatprep.subr.mxu0 0.0
        %1645 = vmatpush1.xpose.msra.mxu0 0.0
        %1646 = vmatprep.subr.mxu0 0.0
        %1647 = vmatpush1.xpose.msra.mxu0 0.0
        %1648 = vmatprep.subr.mxu0 0.0
        %1649 = vmatpush1.xpose.msra.mxu0 0.0
        %1650 = vmatprep.subr.mxu0 0.0
        %1651 = vmatpush1.xpose.msra.mxu0 0.0
        %1652 = vmatprep.subr.mxu0 0.0
        %1653 = vmatpush1.xpose.msra.mxu0 0.0
        %1654 = vmatprep.subr.mxu0 0.0
        %1655 = vmatpush1.xpose.msra.mxu0 0.0
        %1656 = vmatprep.subr.mxu0 0.0
        %1657 = vmatpush1.xpose.msra.mxu0 0.0
        %1658 = vmatprep.subr.mxu0 0.0
        %1659 = vmatpush1.xpose.msra.mxu0 0.0
        %1660 = vmatprep.subr.mxu0 0.0
        %1661 = vmatpush1.xpose.msra.mxu0 0.0
        %1662 = vmatprep.subr.mxu0 0.0
        %1663 = vmatpush1.xpose.msra.mxu0 0.0
        %1664 = vmatprep.subr.mxu0 0.0
        %1665 = vmatpush1.xpose.msra.mxu0 0.0
        %1666 = vmatprep.subr.mxu0 0.0
        %1667 = vmatpush1.xpose.msra.mxu0 0.0
        %1668 = vmatprep.subr.mxu0 0.0
        %1669 = vmatpush1.xpose.msra.mxu0 0.0
        %1670 = vmatprep.subr.mxu0 0.0
        %1671 = vmatpush1.xpose.msra.mxu0 0.0
        %1672 = vmatprep.subr.mxu0 0.0
        %1673 = vmatpush1.xpose.msra.mxu0 0.0
        %1674 = vmatprep.subr.mxu0 0.0
        %1675 = vmatpush1.xpose.msra.mxu0 0.0
        %1676 = vmatprep.subr.mxu0 0.0
        %1677 = vmatpush1.xpose.msra.mxu0 0.0
        %1678 = vmatprep.subr.mxu0 0.0
        %1679 = vmatpush1.xpose.msra.mxu0 0.0
        %1680 = vmatprep.subr.mxu0 0.0
        %1681 = vmatpush1.xpose.msra.mxu0 0.0
        %1682 = vmatprep.subr.mxu0 0.0
        %1683 = vmatpush1.xpose.msra.mxu0 0.0
        %1684 = vmatprep.subr.mxu0 0.0
        %1685 = vmatpush1.xpose.msra.mxu0 0.0
        %1686 = vmatprep.subr.mxu0 0.0
        %1687 = vmatpush1.xpose.msra.mxu0 0.0
        %1688 = vmatprep.subr.mxu0 0.0
        %1689 = vmatpush1.xpose.msra.mxu0 0.0
        %1690 = vmatprep.subr.mxu0 0.0
        %1691 = vmatpush1.xpose.msra.mxu0 0.0
        %1692 = vmatprep.subr.mxu0 0.0
        %1693 = vmatpush1.xpose.msra.mxu0 0.0
        %1694 = vmatprep.subr.mxu0 0.0
        %1695 = vmatpush1.xpose.msra.mxu0 0.0
        %1696 = vmatprep.subr.mxu0 0.0
        %1697 = vmatpush1.xpose.msra.mxu0 0.0
        %1698 = vmatprep.subr.mxu0 0.0
        %1699 = vmatpush1.xpose.msra.mxu0 0.0
        %1700 = vmatprep.subr.mxu0 0.0
        %1701 = vmatpush1.xpose.msra.mxu0 0.0
        %1702 = vmatprep.subr.mxu0 0.0
        %1703 = vmatpush1.xpose.msra.mxu0 0.0
        %1704 = vmatprep.subr.mxu0 0.0
        %1705 = vmatpush1.xpose.msra.mxu0 0.0
        %1706 = vmatprep.mubr.f32.mxu0 0.0
        %1707 = vmatmul.mubr.f32.gmra.mrb[0].mxu0 %v1638
        %v1708 = vpop.f32.mrb[0].mxu0
        %v1709 = vadd.f32 0.0, %v1708
        %v1710 = vpop.f32.mrb[0].mxu0
        %1711 = vdwg.mxu0
        %v1712 = vsel %vm1205, %v1709, -inf
        %1713 = vmax.xlane.f32.xlu0 %v1712
        %v1714 = vpop.xlane.xlu0 %1713
        %v1715 = vsub.f32 %v1709, %v1714
        %v1716 = vmul.f32 %v1715, 1.442695
        %v1717 = vpow.pop %v1716
        %v1718 = vsel %vm1205, %v1717, 0.0
        %1719 = vadd.xlane.f32.xlu0 %v1718
        %v1720 = vpop.xlane.xlu0 %1719
        %v1721 = vrcp.pop %v1720
        %v1722 = vmul.f32 %v1717, %v1721
        %1723 = vrot.lane.b32.xlu0 %v1125, 32
        %v1724 = vpop.permute.xlu0 %1723
        %v1727 = vsel %vm1205, %v1722, 0
        %1729 = vmatprep.subr.mxu0 0.0
        %1730 = vmatpush1.msra.mxu0 %v1724
        %1731 = vmatprep.subr.mxu0 0.0
        %1732 = vmatpush1.msra.mxu0 0.0
        %1733 = vmatprep.subr.mxu0 0.0
        %1734 = vmatpush1.msra.mxu0 0.0
        %1735 = vmatprep.subr.mxu0 0.0
        %1736 = vmatpush1.msra.mxu0 0.0
        %1737 = vmatprep.subr.mxu0 0.0
        %1738 = vmatpush1.msra.mxu0 0.0
        %1739 = vmatprep.subr.mxu0 0.0
        %1740 = vmatpush1.msra.mxu0 0.0
        %1741 = vmatprep.subr.mxu0 0.0
        %1742 = vmatpush1.msra.mxu0 0.0
        %1743 = vmatprep.subr.mxu0 0.0
        %1744 = vmatpush1.msra.mxu0 0.0
        %1745 = vmatprep.subr.mxu0 0.0
        %1746 = vmatpush1.msra.mxu0 0.0
        %1747 = vmatprep.subr.mxu0 0.0
        %1748 = vmatpush1.msra.mxu0 0.0
        %1749 = vmatprep.subr.mxu0 0.0
        %1750 = vmatpush1.msra.mxu0 0.0
        %1751 = vmatprep.subr.mxu0 0.0
        %1752 = vmatpush1.msra.mxu0 0.0
        %1753 = vmatprep.subr.mxu0 0.0
        %1754 = vmatpush1.msra.mxu0 0.0
        %1755 = vmatprep.subr.mxu0 0.0
        %1756 = vmatpush1.msra.mxu0 0.0
        %1757 = vmatprep.subr.mxu0 0.0
        %1758 = vmatpush1.msra.mxu0 0.0
        %1759 = vmatprep.subr.mxu0 0.0
        %1760 = vmatpush1.msra.mxu0 0.0
        %1761 = vmatprep.subr.mxu0 0.0
        %1762 = vmatpush1.msra.mxu0 0.0
        %1763 = vmatprep.subr.mxu0 0.0
        %1764 = vmatpush1.msra.mxu0 0.0
        %1765 = vmatprep.subr.mxu0 0.0
        %1766 = vmatpush1.msra.mxu0 0.0
        %1767 = vmatprep.subr.mxu0 0.0
        %1768 = vmatpush1.msra.mxu0 0.0
        %1769 = vmatprep.subr.mxu0 0.0
        %1770 = vmatpush1.msra.mxu0 0.0
        %1771 = vmatprep.subr.mxu0 0.0
        %1772 = vmatpush1.msra.mxu0 0.0
        %1773 = vmatprep.subr.mxu0 0.0
        %1774 = vmatpush1.msra.mxu0 0.0
        %1775 = vmatprep.subr.mxu0 0.0
        %1776 = vmatpush1.msra.mxu0 0.0
        %1777 = vmatprep.subr.mxu0 0.0
        %1778 = vmatpush1.msra.mxu0 0.0
        %1779 = vmatprep.subr.mxu0 0.0
        %1780 = vmatpush1.msra.mxu0 0.0
        %1781 = vmatprep.subr.mxu0 0.0
        %1782 = vmatpush1.msra.mxu0 0.0
        %1783 = vmatprep.subr.mxu0 0.0
        %1784 = vmatpush1.msra.mxu0 0.0
        %1785 = vmatprep.subr.mxu0 0.0
        %1786 = vmatpush1.msra.mxu0 0.0
        %1787 = vmatprep.subr.mxu0 0.0
        %1788 = vmatpush1.msra.mxu0 0.0
        %1789 = vmatprep.subr.mxu0 0.0
        %1790 = vmatpush1.msra.mxu0 0.0
        %1791 = vmatprep.subr.mxu0 0.0
        %1792 = vmatpush1.msra.mxu0 0.0
        %1793 = vmatprep.mubr.f32.mxu0 0.0
        %1794 = vmatmul.mubr.f32.gmra.mrb[0].mxu0 %v1727
        %v1795 = vpop.f32.mrb[0].mxu0
        %v1796 = vadd.f32 0.0, %v1795
        %v1797 = vpop.f32.mrb[0].mxu0
        %1798 = vdwg.mxu0
        %1800 = vrot.lane.b32.xlu0 %v1796, 96
        %v1801 = vpop.permute.xlu0 %1800
        %vm1803 = vcmask 1048320
        %1804 = vst.msk [vmem:[#allocation3] sm:$0xff] %vm1803, %v1801
        %v1805 = vld [vmem:[#allocation3] sm:$0xff]
        %v1806 = vld [vmem:[%s741] sm:$0xff]
        %v1807 = vld [vmem:[%s741 + $0x8] sm:$0xff]
        %v1808 = vld [vmem:[%s741 + $0x10] sm:$0xff]
        %v1809 = vld [vmem:[%s741 + $0x18] sm:$0xff]
        %v1810 = vld [vmem:[%s741 + $0x20] sm:$0xff]
        %v1811 = vld [vmem:[%s741 + $0x28] sm:$0xff]
        %v1812 = vld [vmem:[%s741 + $0x30] sm:$0xff]
        %v1813 = vld [vmem:[%s741 + $0x38] sm:$0xff]
        %v1814 = vld [vmem:[%s741 + $0x40] sm:$0xff]
        %v1815 = vld [vmem:[%s741 + $0x48] sm:$0xff]
        %v1816 = vld [vmem:[%s741 + $0x50] sm:$0xff]
        %v1817 = vld [vmem:[%s741 + $0x58] sm:$0xff]
        %v1818 = vld [vmem:[%s741 + $0x60] sm:$0xff]
        %v1819 = vld [vmem:[%s741 + $0x68] sm:$0xff]
        %v1820 = vld [vmem:[%s741 + $0x70] sm:$0xff]
        %v1821 = vld [vmem:[%s741 + $0x78] sm:$0xff]
        %v1822 = vld [vmem:[%s871] sm:$0x1]
        %v1824 = vlaneseq
        %v1825 = vshrl.u32 %v1824, 7
        %v1826 = vsub.s32 0, %v1825
        %v1827 = vrot.slane %v1822, %v1826
        %1829 = vmatprep.subr.mxu0 0.0
        %1830 = vmatpush1.msra.mxu0 %v1806
        %1831 = vmatprep.subr.mxu0 0.0
        %1832 = vmatpush1.msra.mxu0 %v1807
        %1833 = vmatprep.subr.mxu0 0.0
        %1834 = vmatpush1.msra.mxu0 %v1808
        %1835 = vmatprep.subr.mxu0 0.0
        %1836 = vmatpush1.msra.mxu0 %v1809
        %1837 = vmatprep.subr.mxu0 0.0
        %1838 = vmatpush1.msra.mxu0 %v1810
        %1839 = vmatprep.subr.mxu0 0.0
        %1840 = vmatpush1.msra.mxu0 %v1811
        %1841 = vmatprep.subr.mxu0 0.0
        %1842 = vmatpush1.msra.mxu0 %v1812
        %1843 = vmatprep.subr.mxu0 0.0
        %1844 = vmatpush1.msra.mxu0 %v1813
        %1845 = vmatprep.subr.mxu0 0.0
        %1846 = vmatpush1.msra.mxu0 %v1814
        %1847 = vmatprep.subr.mxu0 0.0
        %1848 = vmatpush1.msra.mxu0 %v1815
        %1849 = vmatprep.subr.mxu0 0.0
        %1850 = vmatpush1.msra.mxu0 %v1816
        %1851 = vmatprep.subr.mxu0 0.0
        %1852 = vmatpush1.msra.mxu0 %v1817
        %1853 = vmatprep.subr.mxu0 0.0
        %1854 = vmatpush1.msra.mxu0 %v1818
        %1855 = vmatprep.subr.mxu0 0.0
        %1856 = vmatpush1.msra.mxu0 %v1819
        %1857 = vmatprep.subr.mxu0 0.0
        %1858 = vmatpush1.msra.mxu0 %v1820
        %1859 = vmatprep.subr.mxu0 0.0
        %1860 = vmatpush1.msra.mxu0 %v1821
        %1861 = vmatprep.subr.mxu0 0.0
        %1862 = vmatpush1.msra.mxu0 0.0
        %1863 = vmatprep.subr.mxu0 0.0
        %1864 = vmatpush1.msra.mxu0 0.0
        %1865 = vmatprep.subr.mxu0 0.0
        %1866 = vmatpush1.msra.mxu0 0.0
        %1867 = vmatprep.subr.mxu0 0.0
        %1868 = vmatpush1.msra.mxu0 0.0
        %1869 = vmatprep.subr.mxu0 0.0
        %1870 = vmatpush1.msra.mxu0 0.0
        %1871 = vmatprep.subr.mxu0 0.0
        %1872 = vmatpush1.msra.mxu0 0.0
        %1873 = vmatprep.subr.mxu0 0.0
        %1874 = vmatpush1.msra.mxu0 0.0
        %1875 = vmatprep.subr.mxu0 0.0
        %1876 = vmatpush1.msra.mxu0 0.0
        %1877 = vmatprep.subr.mxu0 0.0
        %1878 = vmatpush1.msra.mxu0 0.0
        %1879 = vmatprep.subr.mxu0 0.0
        %1880 = vmatpush1.msra.mxu0 0.0
        %1881 = vmatprep.subr.mxu0 0.0
        %1882 = vmatpush1.msra.mxu0 0.0
        %1883 = vmatprep.subr.mxu0 0.0
        %1884 = vmatpush1.msra.mxu0 0.0
        %1885 = vmatprep.subr.mxu0 0.0
        %1886 = vmatpush1.msra.mxu0 0.0
        %1887 = vmatprep.subr.mxu0 0.0
        %1888 = vmatpush1.msra.mxu0 0.0
        %1889 = vmatprep.subr.mxu0 0.0
        %1890 = vmatpush1.msra.mxu0 0.0
        %1891 = vmatprep.subr.mxu0 0.0
        %1892 = vmatpush1.msra.mxu0 0.0
        %1893 = vmatprep.mubr.f32.mxu0 0.0
        %1894 = vmatmul.mubr.f32.gmra.mrb[0].mxu0 %v1805
        %v1895 = vpop.f32.mrb[0].mxu0
        %v1896 = vadd.f32 %v1827, %v1895
        %v1897 = vpop.f32.mrb[0].mxu0
        %1898 = vdwg.mxu0
        %v1899 = vadd.f32 %v1896, %v893
        %v1900 = vld [vmem:[%s874] sm:$0x1]
        %v1901 = vld [vmem:[%s877] sm:$0x1]
        %1902 = vadd.xlane.f32.xlu0 %v1899
        %v1903 = vpop.xlane.xlu0 %1902
        %v1904 = vmul.f32 %v1903, %v898
        %v1905 = vsub.f32 %v1899, %v1904
        %v1906 = vmul.f32 %v1905, %v1905
        %1907 = vadd.xlane.f32.xlu0 %v1906
        %v1908 = vpop.xlane.xlu0 %1907
        %v1909 = vmul.f32 %v1908, %v898
        %v1910 = vadd.f32 %v1909, 0.02
        %v1911 = vrsqrt.pop %v1910
        %v1912 = vmul.f32 %v1905, %v1911
        %v1914 = vlaneseq
        %v1915 = vshrl.u32 %v1914, 7
        %v1916 = vsub.s32 0, %v1915
        %v1917 = vrot.slane %v1900, %v1916
        %v1919 = vmul.f32 %v1912, %v1917
        %v1921 = vlaneseq
        %v1922 = vshrl.u32 %v1921, 7
        %v1923 = vsub.s32 0, %v1922
        %v1924 = vrot.slane %v1901, %v1923
        %v1926 = vadd.f32 %v1919, %v1924
        %v1927 = vld [vmem:[%s750] sm:$0xff]
        %v1928 = vld [vmem:[%s750 + $0x8] sm:$0xff]
        %v1929 = vld [vmem:[%s750 + $0x10] sm:$0xff]
        %v1930 = vld [vmem:[%s750 + $0x18] sm:$0xff]
        %v1931 = vld [vmem:[%s750 + $0x20] sm:$0xff]
        %v1932 = vld [vmem:[%s750 + $0x28] sm:$0xff]
        %v1933 = vld [vmem:[%s750 + $0x30] sm:$0xff]
        %v1934 = vld [vmem:[%s750 + $0x38] sm:$0xff]
        %v1935 = vld [vmem:[%s750 + $0x40] sm:$0xff]
        %v1936 = vld [vmem:[%s750 + $0x48] sm:$0xff]
        %v1937 = vld [vmem:[%s750 + $0x50] sm:$0xff]
        %v1938 = vld [vmem:[%s750 + $0x58] sm:$0xff]
        %v1939 = vld [vmem:[%s750 + $0x60] sm:$0xff]
        %v1940 = vld [vmem:[%s750 + $0x68] sm:$0xff]
        %v1941 = vld [vmem:[%s750 + $0x70] sm:$0xff]
        %v1942 = vld [vmem:[%s750 + $0x78] sm:$0xff]
        %v1943 = vld [vmem:[%s750 + $0x80] sm:$0xff]
        %v1944 = vld [vmem:[%s750 + $0x88] sm:$0xff]
        %v1945 = vld [vmem:[%s750 + $0x90] sm:$0xff]
        %v1946 = vld [vmem:[%s750 + $0x98] sm:$0xff]
        %v1947 = vld [vmem:[%s750 + $0xa0] sm:$0xff]
        %v1948 = vld [vmem:[%s750 + $0xa8] sm:$0xff]
        %v1949 = vld [vmem:[%s750 + $0xb0] sm:$0xff]
        %v1950 = vld [vmem:[%s750 + $0xb8] sm:$0xff]
        %v1951 = vld [vmem:[%s750 + $0xc0] sm:$0xff]
        %v1952 = vld [vmem:[%s750 + $0xc8] sm:$0xff]
        %v1953 = vld [vmem:[%s750 + $0xd0] sm:$0xff]
        %v1954 = vld [vmem:[%s750 + $0xd8] sm:$0xff]
        %v1955 = vld [vmem:[%s750 + $0xe0] sm:$0xff]
        %v1956 = vld [vmem:[%s750 + $0xe8] sm:$0xff]
        %v1957 = vld [vmem:[%s750 + $0xf0] sm:$0xff]
        %v1958 = vld [vmem:[%s750 + $0xf8] sm:$0xff]
        %v1959 = vld [vmem:[%s881] sm:$0x3]
        %v1961 = vlaneseq
        %v1962 = vshrl.u32 %v1961, 7
        %v1963 = vsub.s32 0, %v1962
        %v1964 = vrot.slane %v1959, %v1963
        %v1965 = vlaneseq
        %v1966 = vshrl.u32 %v1965, 7
        %v1967 = vsub.s32 1, %v1966
        %v1968 = vrot.slane %v1959, %v1967
        %1971 = vmatprep.subr.mxu0 %v1928
        %1972 = vmatpush1.msra.mxu0 %v1927
        %1973 = vmatprep.subr.mxu0 %v1930
        %1974 = vmatpush1.msra.mxu0 %v1929
        %1975 = vmatprep.subr.mxu0 %v1932
        %1976 = vmatpush1.msra.mxu0 %v1931
        %1977 = vmatprep.subr.mxu0 %v1934
        %1978 = vmatpush1.msra.mxu0 %v1933
        %1979 = vmatprep.subr.mxu0 %v1936
        %1980 = vmatpush1.msra.mxu0 %v1935
        %1981 = vmatprep.subr.mxu0 %v1938
        %1982 = vmatpush1.msra.mxu0 %v1937
        %1983 = vmatprep.subr.mxu0 %v1940
        %1984 = vmatpush1.msra.mxu0 %v1939
        %1985 = vmatprep.subr.mxu0 %v1942
        %1986 = vmatpush1.msra.mxu0 %v1941
        %1987 = vmatprep.subr.mxu0 %v1944
        %1988 = vmatpush1.msra.mxu0 %v1943
        %1989 = vmatprep.subr.mxu0 %v1946
        %1990 = vmatpush1.msra.mxu0 %v1945
        %1991 = vmatprep.subr.mxu0 %v1948
        %1992 = vmatpush1.msra.mxu0 %v1947
        %1993 = vmatprep.subr.mxu0 %v1950
        %1994 = vmatpush1.msra.mxu0 %v1949
        %1995 = vmatprep.subr.mxu0 %v1952
        %1996 = vmatpush1.msra.mxu0 %v1951
        %1997 = vmatprep.subr.mxu0 %v1954
        %1998 = vmatpush1.msra.mxu0 %v1953
        %1999 = vmatprep.subr.mxu0 %v1956
        %2000 = vmatpush1.msra.mxu0 %v1955
        %2001 = vmatprep.subr.mxu0 %v1958
        %2002 = vmatpush1.msra.mxu0 %v1957
        %2003 = vmatprep.subr.mxu0 0.0
        %2004 = vmatpush1.msra.mxu0 0.0
        %2005 = vmatprep.subr.mxu0 0.0
        %2006 = vmatpush1.msra.mxu0 0.0
        %2007 = vmatprep.subr.mxu0 0.0
        %2008 = vmatpush1.msra.mxu0 0.0
        %2009 = vmatprep.subr.mxu0 0.0
        %2010 = vmatpush1.msra.mxu0 0.0
        %2011 = vmatprep.subr.mxu0 0.0
        %2012 = vmatpush1.msra.mxu0 0.0
        %2013 = vmatprep.subr.mxu0 0.0
        %2014 = vmatpush1.msra.mxu0 0.0
        %2015 = vmatprep.subr.mxu0 0.0
        %2016 = vmatpush1.msra.mxu0 0.0
        %2017 = vmatprep.subr.mxu0 0.0
        %2018 = vmatpush1.msra.mxu0 0.0
        %2019 = vmatprep.subr.mxu0 0.0
        %2020 = vmatpush1.msra.mxu0 0.0
        %2021 = vmatprep.subr.mxu0 0.0
        %2022 = vmatpush1.msra.mxu0 0.0
        %2023 = vmatprep.subr.mxu0 0.0
        %2024 = vmatpush1.msra.mxu0 0.0
        %2025 = vmatprep.subr.mxu0 0.0
        %2026 = vmatpush1.msra.mxu0 0.0
        %2027 = vmatprep.subr.mxu0 0.0
        %2028 = vmatpush1.msra.mxu0 0.0
        %2029 = vmatprep.subr.mxu0 0.0
        %2030 = vmatpush1.msra.mxu0 0.0
        %2031 = vmatprep.subr.mxu0 0.0
        %2032 = vmatpush1.msra.mxu0 0.0
        %2033 = vmatprep.subr.mxu0 0.0
        %2034 = vmatpush1.msra.mxu0 0.0
        %2035 = vmatprep.mubr.f32.mxu0 0.0
        %2036 = vmatmul.mubr.f32.gmra.mrb[0].mxu0 %v1926
        %v2037 = vpop.f32.mrb[0].mxu0
        %v2038 = vadd.f32 %v1964, %v2037
        %v2039 = vpop.f32.mrb[0].mxu0
        %v2040 = vadd.f32 %v1968, %v2039
        %2041 = vdwg.mxu0
        %v2042 = vmul.f32 %v2038, 0.5
        %v2043 = vmul.f32 %v2040, 0.5
        %v2044 = vmul.f32 %v2038, 0.044715
        %v2045 = vmul.f32 %v2040, 0.044715
        %v2046 = vmul.f32 %v2044, %v2038
        %v2047 = vmul.f32 %v2045, %v2040
        %v2048 = vmul.f32 %v2046, %v2038
        %v2049 = vmul.f32 %v2047, %v2040
        %v2050 = vadd.f32 %v2038, %v2048
        %v2051 = vadd.f32 %v2040, %v2049
        %v2052 = vmul.f32 %v2050, 0.7978845
        %v2053 = vmul.f32 %v2051, 0.7978845
        %v2054 = vtanh.pop %v2052
        %v2055 = vtanh.pop %v2053
        %v2056 = vadd.f32 %v2054, 1.0
        %v2057 = vadd.f32 %v2055, 1.0
        %v2058 = vmul.f32 %v2042, %v2056
        %v2059 = vmul.f32 %v2043, %v2057
        %v2060 = vld [vmem:[%s759] sm:$0xff]
        %v2061 = vld [vmem:[%s759 + $0x8] sm:$0xff]
        %v2062 = vld [vmem:[%s759 + $0x10] sm:$0xff]
        %v2063 = vld [vmem:[%s759 + $0x18] sm:$0xff]
        %v2064 = vld [vmem:[%s759 + $0x20] sm:$0xff]
        %v2065 = vld [vmem:[%s759 + $0x28] sm:$0xff]
        %v2066 = vld [vmem:[%s759 + $0x30] sm:$0xff]
        %v2067 = vld [vmem:[%s759 + $0x38] sm:$0xff]
        %v2068 = vld [vmem:[%s759 + $0x40] sm:$0xff]
        %v2069 = vld [vmem:[%s759 + $0x48] sm:$0xff]
        %v2070 = vld [vmem:[%s759 + $0x50] sm:$0xff]
        %v2071 = vld [vmem:[%s759 + $0x58] sm:$0xff]
        %v2072 = vld [vmem:[%s759 + $0x60] sm:$0xff]
        %v2073 = vld [vmem:[%s759 + $0x68] sm:$0xff]
        %v2074 = vld [vmem:[%s759 + $0x70] sm:$0xff]
        %v2075 = vld [vmem:[%s759 + $0x78] sm:$0xff]
        %v2076 = vld [vmem:[%s759 + $0x80] sm:$0xff]
        %v2077 = vld [vmem:[%s759 + $0x88] sm:$0xff]
        %v2078 = vld [vmem:[%s759 + $0x90] sm:$0xff]
        %v2079 = vld [vmem:[%s759 + $0x98] sm:$0xff]
        %v2080 = vld [vmem:[%s759 + $0xa0] sm:$0xff]
        %v2081 = vld [vmem:[%s759 + $0xa8] sm:$0xff]
        %v2082 = vld [vmem:[%s759 + $0xb0] sm:$0xff]
        %v2083 = vld [vmem:[%s759 + $0xb8] sm:$0xff]
        %v2084 = vld [vmem:[%s759 + $0xc0] sm:$0xff]
        %v2085 = vld [vmem:[%s759 + $0xc8] sm:$0xff]
        %v2086 = vld [vmem:[%s759 + $0xd0] sm:$0xff]
        %v2087 = vld [vmem:[%s759 + $0xd8] sm:$0xff]
        %v2088 = vld [vmem:[%s759 + $0xe0] sm:$0xff]
        %v2089 = vld [vmem:[%s759 + $0xe8] sm:$0xff]
        %v2090 = vld [vmem:[%s759 + $0xf0] sm:$0xff]
        %v2091 = vld [vmem:[%s759 + $0xf8] sm:$0xff]
        %v2092 = vld [vmem:[%s884] sm:$0x1]
        %v2094 = vlaneseq
        %v2095 = vshrl.u32 %v2094, 7
        %v2096 = vsub.s32 0, %v2095
        %v2097 = vrot.slane %v2092, %v2096
        %2099 = vmatprep.subr.mxu0 0.0
        %2100 = vmatpush1.msra.mxu0 %v2060
        %2101 = vmatprep.subr.mxu0 0.0
        %2102 = vmatpush1.msra.mxu0 %v2061
        %2103 = vmatprep.subr.mxu0 0.0
        %2104 = vmatpush1.msra.mxu0 %v2062
        %2105 = vmatprep.subr.mxu0 0.0
        %2106 = vmatpush1.msra.mxu0 %v2063
        %2107 = vmatprep.subr.mxu0 0.0
        %2108 = vmatpush1.msra.mxu0 %v2064
        %2109 = vmatprep.subr.mxu0 0.0
        %2110 = vmatpush1.msra.mxu0 %v2065
        %2111 = vmatprep.subr.mxu0 0.0
        %2112 = vmatpush1.msra.mxu0 %v2066
        %2113 = vmatprep.subr.mxu0 0.0
        %2114 = vmatpush1.msra.mxu0 %v2067
        %2115 = vmatprep.subr.mxu0 0.0
        %2116 = vmatpush1.msra.mxu0 %v2068
        %2117 = vmatprep.subr.mxu0 0.0
        %2118 = vmatpush1.msra.mxu0 %v2069
        %2119 = vmatprep.subr.mxu0 0.0
        %2120 = vmatpush1.msra.mxu0 %v2070
        %2121 = vmatprep.subr.mxu0 0.0
        %2122 = vmatpush1.msra.mxu0 %v2071
        %2123 = vmatprep.subr.mxu0 0.0
        %2124 = vmatpush1.msra.mxu0 %v2072
        %2125 = vmatprep.subr.mxu0 0.0
        %2126 = vmatpush1.msra.mxu0 %v2073
        %2127 = vmatprep.subr.mxu0 0.0
        %2128 = vmatpush1.msra.mxu0 %v2074
        %2129 = vmatprep.subr.mxu0 0.0
        %2130 = vmatpush1.msra.mxu0 %v2075
        %2131 = vmatprep.subr.mxu0 0.0
        %2132 = vmatpush1.msra.mxu0 %v2076
        %2133 = vmatprep.subr.mxu0 0.0
        %2134 = vmatpush1.msra.mxu0 %v2077
        %2135 = vmatprep.subr.mxu0 0.0
        %2136 = vmatpush1.msra.mxu0 %v2078
        %2137 = vmatprep.subr.mxu0 0.0
        %2138 = vmatpush1.msra.mxu0 %v2079
        %2139 = vmatprep.subr.mxu0 0.0
        %2140 = vmatpush1.msra.mxu0 %v2080
        %2141 = vmatprep.subr.mxu0 0.0
        %2142 = vmatpush1.msra.mxu0 %v2081
        %2143 = vmatprep.subr.mxu0 0.0
        %2144 = vmatpush1.msra.mxu0 %v2082
        %2145 = vmatprep.subr.mxu0 0.0
        %2146 = vmatpush1.msra.mxu0 %v2083
        %2147 = vmatprep.subr.mxu0 0.0
        %2148 = vmatpush1.msra.mxu0 %v2084
        %2149 = vmatprep.subr.mxu0 0.0
        %2150 = vmatpush1.msra.mxu0 %v2085
        %2151 = vmatprep.subr.mxu0 0.0
        %2152 = vmatpush1.msra.mxu0 %v2086
        %2153 = vmatprep.subr.mxu0 0.0
        %2154 = vmatpush1.msra.mxu0 %v2087
        %2155 = vmatprep.subr.mxu0 0.0
        %2156 = vmatpush1.msra.mxu0 %v2088
        %2157 = vmatprep.subr.mxu0 0.0
        %2158 = vmatpush1.msra.mxu0 %v2089
        %2159 = vmatprep.subr.mxu0 0.0
        %2160 = vmatpush1.msra.mxu0 %v2090
        %2161 = vmatprep.subr.mxu0 0.0
        %2162 = vmatpush1.msra.mxu0 %v2091
        %2163 = vmatprep.mubr.f32.mxu0 %v2059
        %2164 = vmatmul.mubr.f32.gmra.mrb[0].mxu0 %v2058
        %v2165 = vpop.f32.mrb[0].mxu0
        %v2166 = vadd.f32 %v2097, %v2165
        %v2167 = vpop.f32.mrb[0].mxu0
        %2168 = vdwg.mxu0
        %v2169 = vadd.f32 %v2166, %v1899
        %2170 = vst [vmem:[#allocation2] sm:$0xff] %v2169
        %2171 = vst [vmem:[%s854] sm:$0xff] %v2169
        %p2172 = scmp.eq.s32.totalorder %s44, 2
        // Predicated region
        $region117: #{tpu_custom_call.1} parent=83 // pred_check
          %p2173 = pneg %p2172
        $region118: #{tpu_custom_call.1} parent=83 // pred_check_branch
          %2175 = sbr.rel (%p2173) target = $region120
        $region119: #{tpu_custom_call.1} parent=83 // pred_region
          %v2176 = vld [vmem:[%s14] sm:$0x1]
          %v2177 = vld [vmem:[%s15] sm:$0x1]
          %2178 = vadd.xlane.f32.xlu0 %v2169
          %v2179 = vpop.xlane.xlu0 %2178
          %v2180 = vmul.f32 %v2179, %v898
          %v2181 = vsub.f32 %v2169, %v2180
          %v2182 = vmul.f32 %v2181, %v2181
          %2183 = vadd.xlane.f32.xlu0 %v2182
          %v2184 = vpop.xlane.xlu0 %2183
          %v2185 = vmul.f32 %v2184, %v898
          %v2186 = vadd.f32 %v2185, 0.02
          %v2187 = vrsqrt.pop %v2186
          %v2188 = vmul.f32 %v2181, %v2187
          %v2190 = vlaneseq
          %v2191 = vshrl.u32 %v2190, 7
          %v2192 = vsub.s32 0, %v2191
          %v2193 = vrot.slane %v2176, %v2192
          %v2195 = vmul.f32 %v2188, %v2193
          %v2197 = vlaneseq
          %v2198 = vshrl.u32 %v2197, 7
          %v2199 = vsub.s32 0, %v2198
          %v2200 = vrot.slane %v2177, %v2199
          %v2202 = vadd.f32 %v2195, %v2200
          %2203 = vst [vmem:[%s861] sm:$0xff] %v2202
        $region120: #{tpu_custom_call.1} parent=83 // pred_fallthru
          _
        %s2204 = sand.u32 %s462, 1
        %s2205 = scalar_lea.sflag [#allocation6], %s2204
        %s2206 = sand.u32 %s462, 1
        %s2207 = smul.addr %s2206, 8
        %s2208 = scalar_lea.vmem [#allocation14], %s2207
        %s2209 = sand.u32 %s488, 1
        %s2210 = scalar_lea.sflag [#allocation16], %s2209
        %s2211 = sand.u32 %s488, 1
        %s2212 = smul.addr %s2211, 8
        %s2213 = scalar_lea.vmem [#allocation15], %s2212
        // Predicated region
        $region121: #{tpu_custom_call.1} parent=83 // pred_check
          %p2214 = pneg %p472
        $region122: #{tpu_custom_call.1} parent=83 // pred_check_branch
          %2216 = sbr.rel (%p2214) target = $region124
        $region123: #{tpu_custom_call.1} parent=83 // pred_region
          %s2218 = ssub.s32 128, 128
          %2219 = vsyncadd %s2205, %s2218
          %s2220 = smul.addr %s44, 2
          %s2221 = sadd.s32 %s43, %s2220
          %s2222 = smul.addr %s2221, 128
          %s2223 = scalar_lea.hbm %s16, %s2222
          %s2225 = sshll.u32 %s2208, 4
          %s2226 = int_to_ptr.vmem [resolvable:$true] %s2225
          %2228 = dma.vmem_to_hbm [thread:$0]  %s2226, 128, %s2223, %s2205
        $region124: #{tpu_custom_call.1} parent=83 // pred_fallthru
          _
        // Predicated region
        $region125: #{tpu_custom_call.1} parent=83 // pred_check
          %p2229 = pneg %p498
        $region126: #{tpu_custom_call.1} parent=83 // pred_check_branch
          %2231 = sbr.rel (%p2229) target = $region128
        $region127: #{tpu_custom_call.1} parent=83 // pred_region
          %s2233 = ssub.s32 128, 128
          %2234 = vsyncadd %s2210, %s2233
          %s2235 = smul.addr %s43, 128
          %s2236 = scalar_lea.hbm %s17, %s2235
          %s2238 = sshll.u32 %s2213, 4
          %s2239 = int_to_ptr.vmem [resolvable:$true] %s2238
          %2241 = dma.vmem_to_hbm [thread:$0]  %s2239, 128, %s2236, %s2210
        $region128: #{tpu_custom_call.1} parent=83 // pred_fallthru
          _
      $region84: #{tpu_custom_call.1} parent=5 // pred_fallthru
        _
      %p2242 = scmp.le.s32.totalorder 2, %s34
      // Predicated region
      $region129: #{tpu_custom_call.1} parent=5 // pred_check
        %p2243 = pneg %p2242
      $region130: #{tpu_custom_call.1} parent=5 // pred_check_branch
        %2245 = sbr.rel (%p2243) target = $region132
      $region131: #{tpu_custom_call.1} parent=5 // pred_region
        %s2246 = ssub.s32 %s34, 2
        // Predicated region
        $region133: #{tpu_custom_call.1} parent=131 // pred_check
          %p2247 = pneg %p478
        $region134: #{tpu_custom_call.1} parent=131 // pred_check_branch
          %2249 = sbr.rel (%p2247) target = $region136
        $region135: #{tpu_custom_call.1} parent=131 // pred_region
          %s2250 = sand.u32 %s463, 1
          %s2251 = scalar_lea.sflag [#allocation6], %s2250
          %s2252 = sand.u32 %s463, 1
          %s2253 = smul.addr %s2252, 8
          %s2254 = scalar_lea.vmem [#allocation14], %s2253
          %2255 = dma.done %s2251, 128
        $region136: #{tpu_custom_call.1} parent=131 // pred_fallthru
          _
        // Predicated region
        $region137: #{tpu_custom_call.1} parent=131 // pred_check
          %p2256 = pneg %p504
        $region138: #{tpu_custom_call.1} parent=131 // pred_check_branch
          %2258 = sbr.rel (%p2256) target = $region140
        $region139: #{tpu_custom_call.1} parent=131 // pred_region
          %s2259 = sand.u32 %s489, 1
          %s2260 = scalar_lea.sflag [#allocation16], %s2259
          %s2261 = sand.u32 %s489, 1
          %s2262 = smul.addr %s2261, 8
          %s2263 = scalar_lea.vmem [#allocation15], %s2262
          %2264 = dma.done %s2260, 128
        $region140: #{tpu_custom_call.1} parent=131 // pred_fallthru
          _
      $region132: #{tpu_custom_call.1} parent=5 // pred_fallthru
        _
    $region6: #{tpu_custom_call.1} parent=1 // loop_footer
      %s38 = sadd.s32 1, %s34
    $region7: #{tpu_custom_call.1} parent=1 // loop_footer_branch
      %33 = sbr.rel target = $region3
    $region8: #{tpu_custom_call.1} parent=1 // loop_exit
      _
    %2265 = vsyncpa [#allocation5], 1
    %s2266 = scalar_lea.sflag [#allocation5], 1
    %2267 = vsyncpa %s2266, 1
    %2268 = vsyncpa [#allocation8], 1
    %2269 = vsyncpa [#allocation6], 1
    %s2270 = scalar_lea.sflag [#allocation6], 1
    %2271 = vsyncpa %s2270, 1
    %2272 = vsyncpa [#allocation16], 1
    %s2273 = scalar_lea.sflag [#allocation16], 1
    %2274 = vsyncpa %s2273, 1

</llo_original>
